<compile_context>
chip_gen: v7x
topology: tpu7x:2x2x1
jax: 0.10.0
libtpu: 0.0.40
codegen_flags: <defaults>
</compile_context>

<pallas_src>
import functools

import jax
import jax.numpy as jnp
from jax.experimental import pallas as pl
from jax.experimental.pallas import tpu as pltpu


def _round_up(x, m):
    return ((x + m - 1) // m) * m


def _sublane_min(dtype):
    # 8 for 32-bit, 16 for 16-bit, 32 for 8-bit packed sublane granules.
    return max(8, 256 // (jnp.dtype(dtype).itemsize * 8))


def _vmem_capacity_bytes():
    try:
        return int(pltpu.get_tpu_info().vmem_capacity_bytes)
    except Exception:
        return 64 << 20        # conservative default: v7x per-TensorCore VMEM


# --------------------------------------------------------------------------
# Fused path: all weights VMEM-resident, batch axis streamed.
# --------------------------------------------------------------------------
def _connected_head_kernel(z_ref, parent_ref, ws_ref, bs_ref, wc_ref, bc_ref,
                           out_ref, *, depth):
    """One batch tile: fused MLP + connection branch (all operands in VMEM)."""
    mm_dtype = ws_ref.dtype                 # bf16 operands -> MXU fast path
    h = z_ref[...].astype(mm_dtype)         # (TB, Dp) bf16 live intermediate

    # projection head: (depth-1) x (Linear + ReLU), then a final Linear
    for layer in range(depth - 1):
        acc = jnp.dot(h, ws_ref[layer], preferred_element_type=jnp.float32)
        acc = acc + bs_ref[layer].astype(jnp.float32)      # (1, Dp) broadcast
        h = jnp.maximum(acc, 0.0).astype(mm_dtype)         # ReLU f32 -> bf16
    proj = jnp.dot(h, ws_ref[depth - 1], preferred_element_type=jnp.float32)
    proj = proj + bs_ref[depth - 1].astype(jnp.float32)

    # connection branch: ReLU(Linear_c(parent_proj_z))
    c = jnp.dot(parent_ref[...].astype(mm_dtype), wc_ref[...],
                preferred_element_type=jnp.float32)
    c = jnp.maximum(c + bc_ref[...].astype(jnp.float32), 0.0)

    out_ref[...] = (proj + c).astype(out_ref.dtype)


def prepare_connected_head_params(ws, bs, wc, bc, *, weight_dtype=jnp.bfloat16):
    """Pad features to a lane-dense multiple of 128 and cast weights to bf16
    ONCE (hoisted out of the per-call path).

    ws: [depth, D, D] stored (in, out); bs: [depth, 1, D] (or [depth, D]);
    wc: [D, D]; bc: [1, D] (or [D]).
    """
    depth, D, _ = ws.shape
    Dp = _round_up(max(D, 128), 128)
    pad = Dp - D
    bs = bs.reshape(depth, 1, D)
    bc = bc.reshape(1, D)
    return dict(
        depth=depth, d=D, dp=Dp, weight_dtype=jnp.dtype(weight_dtype),
        ws=jnp.pad(ws, ((0, 0), (0, pad), (0, pad))).astype(weight_dtype),
        bs=jnp.pad(bs, ((0, 0), (0, 0), (0, pad))).astype(jnp.float32),
        wc=jnp.pad(wc, ((0, pad), (0, pad))).astype(weight_dtype),
        bc=jnp.pad(bc, ((0, 0), (0, pad))).astype(jnp.float32),
    )


# --------------------------------------------------------------------------
# Fallback path: weights too big for VMEM -> per-layer tiled matmul kernels.
# --------------------------------------------------------------------------
def _linear_kernel(x_ref, w_ref, b_ref, o_ref, acc_ref, *, relu):
    k = pl.program_id(2)

    @pl.when(k == 0)
    def _():
        acc_ref[...] = jnp.zeros_like(acc_ref)

    acc_ref[...] += jnp.dot(x_ref[...], w_ref[...],
                            preferred_element_type=jnp.float32)

    @pl.when(k == pl.num_programs(2) - 1)
    def _():
        r = acc_ref[...] + b_ref[...].astype(jnp.float32)
        if relu:
            r = jnp.maximum(r, 0.0)
        o_ref[...] = r.astype(o_ref.dtype)


def _pick_tile(dim, candidates=(512, 256, 128)):
    for c in candidates:
        if dim % c == 0:
            return c
    return dim


def _linear(x, w, b, *, relu, out_dtype, tm):
    M, K = x.shape
    _, N = w.shape
    tn = _pick_tile(N)
    tk = _pick_tile(K)
    return pl.pallas_call(
        functools.partial(_linear_kernel, relu=relu),
        out_shape=jax.ShapeDtypeStruct((M, N), out_dtype),
        grid=(M // tm, N // tn, K // tk),
        in_specs=[
            pl.BlockSpec((tm, tk), lambda i, j, k: (i, k)),
            pl.BlockSpec((tk, tn), lambda i, j, k: (k, j)),
            pl.BlockSpec((1, tn), lambda i, j, k: (0, j)),
        ],
        out_specs=pl.BlockSpec((tm, tn), lambda i, j, k: (i, j)),
        scratch_shapes=[pltpu.VMEM((tm, tn), jnp.float32)],
        compiler_params=pltpu.CompilerParams(
            dimension_semantics=("parallel", "parallel", "arbitrary")),
    )(x, w, b)


def _connected_head_fallback(z, parent_proj_z, params):
    """Weight-tiled path for large depth*D^2 (weights not VMEM-resident)."""
    B, D = z.shape
    depth, Dp = params["depth"], params["dp"]
    wd = params["weight_dtype"]
    tm = min(256, _round_up(B, 32))          # 32 covers sublane min for bf16/i8
    Mp = _round_up(B, tm)
    z_p = jnp.pad(z, ((0, Mp - B), (0, Dp - D))).astype(wd)
    par_p = jnp.pad(parent_proj_z, ((0, Mp - B), (0, Dp - D))).astype(wd)

    h = z_p
    for layer in range(depth - 1):
        h = _linear(h, params["ws"][layer], params["bs"][layer],
                    relu=True, out_dtype=wd, tm=tm)
    proj = _linear(h, params["ws"][depth - 1], params["bs"][depth - 1],
                   relu=False, out_dtype=jnp.float32, tm=tm)
    c = _linear(par_p, params["wc"], params["bc"],
                relu=True, out_dtype=jnp.float32, tm=tm)
    return (proj + c).astype(z.dtype)[:B, :D]


# --------------------------------------------------------------------------
# Public wrapper.
# --------------------------------------------------------------------------
def connected_projection_head(z, parent_proj_z, params, *, block_b=512,
                              force_fallback=False):
    """z, parent_proj_z: [B, D]; params from prepare_connected_head_params.
    Returns [B, D] in z.dtype."""
    B, D = z.shape
    assert D == params["d"] and parent_proj_z.shape == z.shape
    depth, Dp = params["depth"], params["dp"]
    wd = params["weight_dtype"]

    in_itm = jnp.dtype(z.dtype).itemsize
    sub = max(_sublane_min(z.dtype), _sublane_min(parent_proj_z.dtype))

    w_bytes = (depth + 1) * Dp * Dp * wd.itemsize          # single-buffered
    b_bytes = (depth + 1) * Dp * 4
    cap = int(_vmem_capacity_bytes() * 0.85)   # headroom: ~54 MiB v7x, ~109 MiB v6e/v5e

    def vmem_need(tb):
        # Buffered(1) weights + double-buffered z/parent/out tiles + scratch.
        return (w_bytes + b_bytes
                + 2 * 2 * tb * Dp * in_itm
                + 2 * tb * Dp * in_itm
                + (2 << 20))

    Bs = _round_up(B, sub)
    TB = min(_round_up(block_b, sub), Bs)
    # v7x megacore: with a large batch guarantee >= 2 parallel batch tiles so
    # both TensorCores get work; tiny problems stay single-step (per-step
    # overhead dominated there).
    if Bs // TB < 2 and Bs >= 2 * 256:
        TB = _round_up(pl.cdiv(Bs, 2), sub)
    # Shrink the batch tile until resident weights + streamed tiles fit VMEM.
    while TB > sub and vmem_need(TB) > cap:
        TB = _round_up(TB // 2, sub)

    if force_fallback or vmem_need(TB) > cap:
        # Weight stack itself exceeds the VMEM budget -> tiled per-layer path.
        return _connected_head_fallback(z, parent_proj_z, params)

    Bp = _round_up(Bs, TB)
    z_p = jnp.pad(z, ((0, Bp - B), (0, Dp - D)))
    par_p = jnp.pad(parent_proj_z, ((0, Bp - B), (0, Dp - D)))

    cost = pl.CostEstimate(
        flops=int(2 * Bp * Dp * Dp * (depth + 1)),
        transcendentals=0,
        bytes_accessed=int(w_bytes + b_bytes + 3 * Bp * Dp * in_itm))
    vmem_limit = int(min(cap, max(32 << 20, 2 * vmem_need(TB))))

    kernel = functools.partial(_connected_head_kernel, depth=depth)

    def _call(single_buffer_weights):
        wkw = dict(pipeline_mode=pl.Buffered(1)) if single_buffer_weights else {}
        in_specs = [
            pl.BlockSpec((TB, Dp), lambda i: (i, 0)),       # z batch tile
            pl.BlockSpec((TB, Dp), lambda i: (i, 0)),       # parent batch tile
            # Constant-index weights/biases: fetched once, single VMEM copy.
            pl.BlockSpec((depth, Dp, Dp), lambda i: (0, 0, 0), **wkw),
            pl.BlockSpec((depth, 1, Dp), lambda i: (0, 0, 0), **wkw),
            pl.BlockSpec((Dp, Dp), lambda i: (0, 0), **wkw),
            pl.BlockSpec((1, Dp), lambda i: (0, 0), **wkw),
        ]
        return pl.pallas_call(
            kernel,
            out_shape=jax.ShapeDtypeStruct((Bp, Dp), z.dtype),
            grid=(Bp // TB,),
            in_specs=in_specs,
            out_specs=pl.BlockSpec((TB, Dp), lambda i: (i, 0)),
            compiler_params=pltpu.CompilerParams(
                dimension_semantics=("parallel",),
                vmem_limit_bytes=vmem_limit),
            cost_estimate=cost,
        )(z_p, par_p, params["ws"], params["bs"], params["wc"], params["bc"])

    try:
        out_p = _call(True)
    except Exception:
        out_p = _call(False)   # Buffered(1) unsupported -> default buffering
    return out_p[:B, :D]


# --------------------------------------------------------------------------
# Pure-JAX reference (mirrors the bf16-matmul / f32-accumulate path).
# --------------------------------------------------------------------------
def _reference(z, parent_proj_z, ws, bs, wc, bc, weight_dtype=jnp.bfloat16):
    depth = ws.shape[0]
    wd = weight_dtype
    h = z.astype(jnp.float32)
    for layer in range(depth - 1):
        h = jnp.maximum(
            jnp.dot(h.astype(wd), ws[layer].astype(wd),
                    preferred_element_type=jnp.float32) + bs[layer], 0.0)
    proj = jnp.dot(h.astype(wd), ws[depth - 1].astype(wd),
                   preferred_element_type=jnp.float32) + bs[depth - 1]
    c = jnp.maximum(
        jnp.dot(parent_proj_z.astype(wd), wc.astype(wd),
                preferred_element_type=jnp.float32) + bc, 0.0)
    return (proj + c).astype(z.dtype)


if __name__ == "__main__":
    B, D, depth = 48, 32, 2   # batch, n_latents (== connection_dim), MLP depth

    key = jax.random.PRNGKey(0)
    kz, kp, kw, kb, kwc, kbc = jax.random.split(key, 6)

    z = jax.random.normal(kz, (B, D), dtype=jnp.float32)
    parent_proj_z = jax.random.normal(kp, (B, D), dtype=jnp.float32)

    # deterministic synthetic init:
    #   network   -> kaiming_uniform-style: U(-sqrt(6/fan_in), sqrt(6/fan_in))
    #   network_c -> plain uniform: U(-1/sqrt(fan_in), 1/sqrt(fan_in))
    bound_k = (6.0 / D) ** 0.5
    ws = jax.random.uniform(kw, (depth, D, D), jnp.float32, -bound_k, bound_k)
    bs = jax.random.uniform(kb, (depth, 1, D), jnp.float32, -0.01, 0.01)
    bound_u = 1.0 / (D ** 0.5)
    wc = jax.random.uniform(kwc, (D, D), jnp.float32, -bound_u, bound_u)
    bc = jax.random.uniform(kbc, (1, D), jnp.float32, -bound_u, bound_u)

    params = prepare_connected_head_params(ws, bs, wc, bc)   # pad/cast once
    ref = _reference(z, parent_proj_z, ws, bs, wc, bc)

    # multi-tile fused path (3 batch tiles -> exercises pipeline + parallel axis)
    out = jax.block_until_ready(
        connected_projection_head(z, parent_proj_z, params, block_b=16))
    assert out.shape == (B, D)
    assert jnp.allclose(out, ref, atol=2e-2, rtol=2e-2), "multi-tile mismatch"

    # single-step fused path (default block_b -> one grid step for small B)
    out1 = jax.block_until_ready(
        connected_projection_head(z, parent_proj_z, params))
    assert jnp.allclose(out1, ref, atol=2e-2, rtol=2e-2), "single-tile mismatch"

    # weight-tiled fallback (path used when weights exceed the VMEM budget)
    out_fb = jax.block_until_ready(
        connected_projection_head(z, parent_proj_z, params, force_fallback=True))
    assert jnp.allclose(out_fb, ref, atol=2e-2, rtol=2e-2), "fallback mismatch"

    print("KERNEL_OK")
</pallas_src>

<mosaic_0001>
module attributes {stable_mosaic.version = 11 : i64} {
  func.func @_connected_head_kernel(%arg0: i32, %arg1: memref<16x128xf32, #tpu.memory_space<vmem>>, %arg2: memref<16x128xf32, #tpu.memory_space<vmem>>, %arg3: memref<2x128x128xbf16, #tpu.memory_space<vmem>>, %arg4: memref<2x1x128xf32, #tpu.memory_space<vmem>>, %arg5: memref<128x128xbf16, #tpu.memory_space<vmem>>, %arg6: memref<1x128xf32, #tpu.memory_space<vmem>>, %arg7: memref<16x128xf32, #tpu.memory_space<vmem>>) attributes {dimension_semantics = [#tpu.dimension_semantics<parallel>], iteration_bounds = array<i64: 3>, scalar_prefetch = 0 : i64, scratch_operands = 0 : i64, tpu.core_type = #tpu.core_type<tc>, window_params = [{transform_indices = @transform_0, window_bounds = array<i64: 16, 128>}, {transform_indices = @transform_1, window_bounds = array<i64: 16, 128>}, {pipeline_mode = #tpu.pipeline_mode<synchronous>, transform_indices = @transform_2, window_bounds = array<i64: 2, 128, 128>}, {pipeline_mode = #tpu.pipeline_mode<synchronous>, transform_indices = @transform_3, window_bounds = array<i64: 2, 1, 128>}, {pipeline_mode = #tpu.pipeline_mode<synchronous>, transform_indices = @transform_4, window_bounds = array<i64: 128, 128>}, {pipeline_mode = #tpu.pipeline_mode<synchronous>, transform_indices = @transform_5, window_bounds = array<i64: 1, 128>}, {transform_indices = @transform_6, window_bounds = array<i64: 16, 128>}]} {
    %c0 = arith.constant 0 : index
    %c0_0 = arith.constant 0 : index
    %0 = vector.load %arg1[%c0, %c0_0] : memref<16x128xf32, #tpu.memory_space<vmem>>, vector<16x128xf32>
    %1 = arith.truncf %0 : vector<16x128xf32> to vector<16x128xbf16>
    %c0_1 = arith.constant 0 : index
    %c0_2 = arith.constant 0 : index
    %c0_3 = arith.constant 0 : index
    %2 = vector.load %arg3[%c0_1, %c0_2, %c0_3] : memref<2x128x128xbf16, #tpu.memory_space<vmem>>, vector<1x128x128xbf16>
    %3 = vector.shape_cast %2 : vector<1x128x128xbf16> to vector<128x128xbf16>
    %cst = arith.constant dense<0.000000e+00> : vector<16x128xf32>
    %4 = tpu.matmul %1, %3, %cst {dimension_numbers = #tpu.dot_dimension_numbers<[1], [0], [0], [1], [0, 0, 1, 1], [], []>} : vector<16x128xbf16>, vector<128x128xbf16>, vector<16x128xf32> -> vector<16x128xf32>
    %c0_4 = arith.constant 0 : index
    %c0_5 = arith.constant 0 : index
    %c0_6 = arith.constant 0 : index
    %5 = vector.load %arg4[%c0_4, %c0_5, %c0_6] : memref<2x1x128xf32, #tpu.memory_space<vmem>>, vector<1x1x128xf32>
    %6 = vector.shape_cast %5 : vector<1x1x128xf32> to vector<1x128xf32>
    %7 = vector.broadcast %6 : vector<1x128xf32> to vector<16x128xf32>
    %8 = arith.addf %4, %7 : vector<16x128xf32>
    %cst_7 = arith.constant 0.000000e+00 : f32
    %9 = vector.broadcast %cst_7 : f32 to vector<16x128xf32>
    %10 = arith.maximumf %8, %9 : vector<16x128xf32>
    %11 = arith.truncf %10 : vector<16x128xf32> to vector<16x128xbf16>
    %c1 = arith.constant 1 : index
    %c0_8 = arith.constant 0 : index
    %c0_9 = arith.constant 0 : index
    %12 = vector.load %arg3[%c1, %c0_8, %c0_9] : memref<2x128x128xbf16, #tpu.memory_space<vmem>>, vector<1x128x128xbf16>
    %13 = vector.shape_cast %12 : vector<1x128x128xbf16> to vector<128x128xbf16>
    %cst_10 = arith.constant dense<0.000000e+00> : vector<16x128xf32>
    %14 = tpu.matmul %11, %13, %cst_10 {dimension_numbers = #tpu.dot_dimension_numbers<[1], [0], [0], [1], [0, 0, 1, 1], [], []>} : vector<16x128xbf16>, vector<128x128xbf16>, vector<16x128xf32> -> vector<16x128xf32>
    %c1_11 = arith.constant 1 : index
    %c0_12 = arith.constant 0 : index
    %c0_13 = arith.constant 0 : index
    %15 = vector.load %arg4[%c1_11, %c0_12, %c0_13] : memref<2x1x128xf32, #tpu.memory_space<vmem>>, vector<1x1x128xf32>
    %16 = vector.shape_cast %15 : vector<1x1x128xf32> to vector<1x128xf32>
    %17 = vector.broadcast %16 : vector<1x128xf32> to vector<16x128xf32>
    %18 = arith.addf %14, %17 : vector<16x128xf32>
    %c0_14 = arith.constant 0 : index
    %c0_15 = arith.constant 0 : index
    %19 = vector.load %arg2[%c0_14, %c0_15] : memref<16x128xf32, #tpu.memory_space<vmem>>, vector<16x128xf32>
    %20 = arith.truncf %19 : vector<16x128xf32> to vector<16x128xbf16>
    %c0_16 = arith.constant 0 : index
    %c0_17 = arith.constant 0 : index
    %21 = vector.load %arg5[%c0_16, %c0_17] : memref<128x128xbf16, #tpu.memory_space<vmem>>, vector<128x128xbf16>
    %cst_18 = arith.constant dense<0.000000e+00> : vector<16x128xf32>
    %22 = tpu.matmul %20, %21, %cst_18 {dimension_numbers = #tpu.dot_dimension_numbers<[1], [0], [0], [1], [0, 0, 1, 1], [], []>} : vector<16x128xbf16>, vector<128x128xbf16>, vector<16x128xf32> -> vector<16x128xf32>
    %c0_19 = arith.constant 0 : index
    %c0_20 = arith.constant 0 : index
    %23 = vector.load %arg6[%c0_19, %c0_20] : memref<1x128xf32, #tpu.memory_space<vmem>>, vector<1x128xf32>
    %24 = vector.broadcast %23 : vector<1x128xf32> to vector<16x128xf32>
    %25 = arith.addf %22, %24 : vector<16x128xf32>
    %cst_21 = arith.constant 0.000000e+00 : f32
    %26 = vector.broadcast %cst_21 : f32 to vector<16x128xf32>
    %27 = arith.maximumf %25, %26 : vector<16x128xf32>
    %28 = arith.addf %18, %27 : vector<16x128xf32>
    %c0_22 = arith.constant 0 : index
    %c0_23 = arith.constant 0 : index
    %29 = vector.load %arg7[%c0_22, %c0_23] : memref<16x128xf32, #tpu.memory_space<vmem>>, vector<16x128xf32>
    tpu.vector_store %arg7[%c0_22, %c0_23], %28 {strides = array<i32>} : memref<16x128xf32, #tpu.memory_space<vmem>>, vector<16x128xf32>,
    return
  }
  func.func @transform_0(%arg0: i32) -> (i32, i32) {
    %c0_i32 = arith.constant 0 : i32
    %c0_i32_0 = arith.constant 0 : i32
    return %arg0, %c0_i32 : i32, i32
  }
  func.func @transform_1(%arg0: i32) -> (i32, i32) {
    %c0_i32 = arith.constant 0 : i32
    %c0_i32_0 = arith.constant 0 : i32
    return %arg0, %c0_i32 : i32, i32
  }
  func.func @transform_2(%arg0: i32) -> (i32, i32, i32) {
    %c0_i32 = arith.constant 0 : i32
    %c0_i32_0 = arith.constant 0 : i32
    %c0_i32_1 = arith.constant 0 : i32
    %c0_i32_2 = arith.constant 0 : i32
    return %c0_i32, %c0_i32_0, %c0_i32_1 : i32, i32, i32
  }
  func.func @transform_3(%arg0: i32) -> (i32, i32, i32) {
    %c0_i32 = arith.constant 0 : i32
    %c0_i32_0 = arith.constant 0 : i32
    %c0_i32_1 = arith.constant 0 : i32
    %c0_i32_2 = arith.constant 0 : i32
    return %c0_i32, %c0_i32_0, %c0_i32_1 : i32, i32, i32
  }
  func.func @transform_4(%arg0: i32) -> (i32, i32) {
    %c0_i32 = arith.constant 0 : i32
    %c0_i32_0 = arith.constant 0 : i32
    %c0_i32_1 = arith.constant 0 : i32
    return %c0_i32, %c0_i32_0 : i32, i32
  }
  func.func @transform_5(%arg0: i32) -> (i32, i32) {
    %c0_i32 = arith.constant 0 : i32
    %c0_i32_0 = arith.constant 0 : i32
    %c0_i32_1 = arith.constant 0 : i32
    return %c0_i32, %c0_i32_0 : i32, i32
  }
  func.func @transform_6(%arg0: i32) -> (i32, i32) {
    %c0_i32 = arith.constant 0 : i32
    %c0_i32_0 = arith.constant 0 : i32
    return %arg0, %c0_i32 : i32, i32
  }
}

module attributes {stable_mosaic.version = 11 : i64} {
  func.func @_connected_head_kernel(%arg0: i32, %arg1: memref<16x128xf32, #tpu.memory_space<vmem>>, %arg2: memref<16x128xf32, #tpu.memory_space<vmem>>, %arg3: memref<2x128x128xbf16, #tpu.memory_space<vmem>>, %arg4: memref<2x1x128xf32, #tpu.memory_space<vmem>>, %arg5: memref<128x128xbf16, #tpu.memory_space<vmem>>, %arg6: memref<1x128xf32, #tpu.memory_space<vmem>>, %arg7: memref<16x128xf32, #tpu.memory_space<vmem>>) attributes {dimension_semantics = [#tpu.dimension_semantics<parallel>], iteration_bounds = array<i64: 3>, scalar_prefetch = 0 : i64, scratch_operands = 0 : i64, tpu.core_type = #tpu.core_type<tc>, window_params = [{transform_indices = @transform_0, window_bounds = array<i64: 16, 128>}, {transform_indices = @transform_1, window_bounds = array<i64: 16, 128>}, {pipeline_mode = #tpu.pipeline_mode<synchronous>, transform_indices = @transform_2, window_bounds = array<i64: 2, 128, 128>}, {pipeline_mode = #tpu.pipeline_mode<synchronous>, transform_indices = @transform_3, window_bounds = array<i64: 2, 1, 128>}, {pipeline_mode = #tpu.pipeline_mode<synchronous>, transform_indices = @transform_4, window_bounds = array<i64: 128, 128>}, {pipeline_mode = #tpu.pipeline_mode<synchronous>, transform_indices = @transform_5, window_bounds = array<i64: 1, 128>}, {transform_indices = @transform_6, window_bounds = array<i64: 16, 128>}]} {
    %c0 = arith.constant 0 : index
    %c0_0 = arith.constant 0 : index
    %0 = vector.load %arg1[%c0, %c0_0] : memref<16x128xf32, #tpu.memory_space<vmem>>, vector<16x128xf32>
    %1 = arith.truncf %0 : vector<16x128xf32> to vector<16x128xbf16>
    %c0_1 = arith.constant 0 : index
    %c0_2 = arith.constant 0 : index
    %c0_3 = arith.constant 0 : index
    %2 = vector.load %arg3[%c0_1, %c0_2, %c0_3] : memref<2x128x128xbf16, #tpu.memory_space<vmem>>, vector<1x128x128xbf16>
    %3 = vector.shape_cast %2 : vector<1x128x128xbf16> to vector<128x128xbf16>
    %cst = arith.constant dense<0.000000e+00> : vector<16x128xf32>
    %4 = tpu.matmul %1, %3, %cst {dimension_numbers = #tpu.dot_dimension_numbers<[1], [0], [0], [1], [0, 0, 1, 1], [], []>} : vector<16x128xbf16>, vector<128x128xbf16>, vector<16x128xf32> -> vector<16x128xf32>
    %c0_4 = arith.constant 0 : index
    %c0_5 = arith.constant 0 : index
    %c0_6 = arith.constant 0 : index
    %5 = vector.load %arg4[%c0_4, %c0_5, %c0_6] : memref<2x1x128xf32, #tpu.memory_space<vmem>>, vector<1x1x128xf32>
    %6 = vector.shape_cast %5 : vector<1x1x128xf32> to vector<1x128xf32>
    %7 = vector.broadcast %6 : vector<1x128xf32> to vector<16x128xf32>
    %8 = arith.addf %4, %7 : vector<16x128xf32>
    %cst_7 = arith.constant 0.000000e+00 : f32
    %9 = vector.broadcast %cst_7 : f32 to vector<16x128xf32>
    %10 = arith.maximumf %8, %9 : vector<16x128xf32>
    %11 = arith.truncf %10 : vector<16x128xf32> to vector<16x128xbf16>
    %c1 = arith.constant 1 : index
    %c0_8 = arith.constant 0 : index
    %c0_9 = arith.constant 0 : index
    %12 = vector.load %arg3[%c1, %c0_8, %c0_9] : memref<2x128x128xbf16, #tpu.memory_space<vmem>>, vector<1x128x128xbf16>
    %13 = vector.shape_cast %12 : vector<1x128x128xbf16> to vector<128x128xbf16>
    %cst_10 = arith.constant dense<0.000000e+00> : vector<16x128xf32>
    %14 = tpu.matmul %11, %13, %cst_10 {dimension_numbers = #tpu.dot_dimension_numbers<[1], [0], [0], [1], [0, 0, 1, 1], [], []>} : vector<16x128xbf16>, vector<128x128xbf16>, vector<16x128xf32> -> vector<16x128xf32>
    %c1_11 = arith.constant 1 : index
    %c0_12 = arith.constant 0 : index
    %c0_13 = arith.constant 0 : index
    %15 = vector.load %arg4[%c1_11, %c0_12, %c0_13] : memref<2x1x128xf32, #tpu.memory_space<vmem>>, vector<1x1x128xf32>
    %16 = vector.shape_cast %15 : vector<1x1x128xf32> to vector<1x128xf32>
    %17 = vector.broadcast %16 : vector<1x128xf32> to vector<16x128xf32>
    %18 = arith.addf %14, %17 : vector<16x128xf32>
    %c0_14 = arith.constant 0 : index
    %c0_15 = arith.constant 0 : index
    %19 = vector.load %arg2[%c0_14, %c0_15] : memref<16x128xf32, #tpu.memory_space<vmem>>, vector<16x128xf32>
    %20 = arith.truncf %19 : vector<16x128xf32> to vector<16x128xbf16>
    %c0_16 = arith.constant 0 : index
    %c0_17 = arith.constant 0 : index
    %21 = vector.load %arg5[%c0_16, %c0_17] : memref<128x128xbf16, #tpu.memory_space<vmem>>, vector<128x128xbf16>
    %cst_18 = arith.constant dense<0.000000e+00> : vector<16x128xf32>
    %22 = tpu.matmul %20, %21, %cst_18 {dimension_numbers = #tpu.dot_dimension_numbers<[1], [0], [0], [1], [0, 0, 1, 1], [], []>} : vector<16x128xbf16>, vector<128x128xbf16>, vector<16x128xf32> -> vector<16x128xf32>
    %c0_19 = arith.constant 0 : index
    %c0_20 = arith.constant 0 : index
    %23 = vector.load %arg6[%c0_19, %c0_20] : memref<1x128xf32, #tpu.memory_space<vmem>>, vector<1x128xf32>
    %24 = vector.broadcast %23 : vector<1x128xf32> to vector<16x128xf32>
    %25 = arith.addf %22, %24 : vector<16x128xf32>
    %cst_21 = arith.constant 0.000000e+00 : f32
    %26 = vector.broadcast %cst_21 : f32 to vector<16x128xf32>
    %27 = arith.maximumf %25, %26 : vector<16x128xf32>
    %28 = arith.addf %18, %27 : vector<16x128xf32>
    %c0_22 = arith.constant 0 : index
    %c0_23 = arith.constant 0 : index
    %29 = vector.load %arg7[%c0_22, %c0_23] : memref<16x128xf32, #tpu.memory_space<vmem>>, vector<16x128xf32>
    tpu.vector_store %arg7[%c0_22, %c0_23], %28 {strides = array<i32>} : memref<16x128xf32, #tpu.memory_space<vmem>>, vector<16x128xf32>,
    return
  }
  func.func @transform_0(%arg0: i32) -> (i32, i32) {
    %c0_i32 = arith.constant 0 : i32
    %c0_i32_0 = arith.constant 0 : i32
    return %arg0, %c0_i32 : i32, i32
  }
  func.func @transform_1(%arg0: i32) -> (i32, i32) {
    %c0_i32 = arith.constant 0 : i32
    %c0_i32_0 = arith.constant 0 : i32
    return %arg0, %c0_i32 : i32, i32
  }
  func.func @transform_2(%arg0: i32) -> (i32, i32, i32) {
    %c0_i32 = arith.constant 0 : i32
    %c0_i32_0 = arith.constant 0 : i32
    %c0_i32_1 = arith.constant 0 : i32
    %c0_i32_2 = arith.constant 0 : i32
    return %c0_i32, %c0_i32_0, %c0_i32_1 : i32, i32, i32
  }
  func.func @transform_3(%arg0: i32) -> (i32, i32, i32) {
    %c0_i32 = arith.constant 0 : i32
    %c0_i32_0 = arith.constant 0 : i32
    %c0_i32_1 = arith.constant 0 : i32
    %c0_i32_2 = arith.constant 0 : i32
    return %c0_i32, %c0_i32_0, %c0_i32_1 : i32, i32, i32
  }
  func.func @transform_4(%arg0: i32) -> (i32, i32) {
    %c0_i32 = arith.constant 0 : i32
    %c0_i32_0 = arith.constant 0 : i32
    %c0_i32_1 = arith.constant 0 : i32
    return %c0_i32, %c0_i32_0 : i32, i32
  }
  func.func @transform_5(%arg0: i32) -> (i32, i32) {
    %c0_i32 = arith.constant 0 : i32
    %c0_i32_0 = arith.constant 0 : i32
    %c0_i32_1 = arith.constant 0 : i32
    return %c0_i32, %c0_i32_0 : i32, i32
  }
  func.func @transform_6(%arg0: i32) -> (i32, i32) {
    %c0_i32 = arith.constant 0 : i32
    %c0_i32_0 = arith.constant 0 : i32
    return %arg0, %c0_i32 : i32, i32
  }
}

</mosaic_0001>

<llo_original>
// kernel: tpu_custom_call.1
$region0: #{tpu_custom_call.1}
  #allocation0 [shape = 'u32[]', space=smem, size = 0x4, offset = 0x4, fixed_abs, tag = 'smem constant byte address 0x4 - core index']
  #allocation1 [shape = 'u32[144,128]{1,0:T(1,128)}', space=vmem, size = 0x12000, scoped, tag = 'internal scratch']
  %s0 = inlined_call_operand.hbm [shape: f32[48,128], index: 0, kind: input, shape index: {}]
  %s1 = inlined_call_operand.hbm [shape: f32[48,128], index: 1, kind: input, shape index: {}]
  %s2 = inlined_call_operand.hbm [shape: bf16[2,128,128], index: 2, kind: input, shape index: {}]
  %s3 = inlined_call_operand.vmem [shape: f32[2,1,128], index: 3, kind: input, shape index: {}]
  %s4 = inlined_call_operand.hbm [shape: bf16[128,128], index: 4, kind: input, shape index: {}]
  %s5 = inlined_call_operand.vmem [shape: f32[1,128], index: 5, kind: input, shape index: {}]
  %s6 = inlined_call_operand.hbm [shape: f32[48,128], index: 6, kind: output, shape index: {}]
  %s7 = sld [smem:[#allocation0]]
  $region73: #{tpu_custom_call.1} parent=0
    _
  %s9 = ssub.s32 1, %s7
  %s10 = scalar_select 0, %s9, %s7
  $region1: #{tpu_custom_call.1} parent=0
    #allocation2 [shape = 'u8[16384]{0}', space=vmem, size = 0x4000, scoped, tag = 'input window, operand 0']
    #allocation3 [shape = 's32[2]{0}', space=sflag, size = 0x8, scoped, tag = 'scoped memory for tpu_custom_call.1']
    #allocation4 [shape = 's32[2]{0}', space=sflag, size = 0x8, scoped, tag = 'scoped memory for tpu_custom_call.1']
    #allocation5 [shape = 'u8[16384]{0}', space=vmem, size = 0x4000, scoped, tag = 'input window, operand 1']
    #allocation6 [shape = 's32[2]{0}', space=sflag, size = 0x8, scoped, tag = 'scoped memory for tpu_custom_call.1']
    #allocation7 [shape = 'u8[65536]{0}', space=vmem, size = 0x10000, scoped, tag = 'input window, operand 2, single buffered']
    #allocation8 [shape = 'u8[32768]{0}', space=vmem, size = 0x8000, scoped, tag = 'input window, operand 4, single buffered']
    #allocation9 [shape = 's32[1]{0}', space=sflag, size = 0x4, scoped, tag = 'scoped memory for tpu_custom_call.1']
    #allocation10 [shape = 'u8[16384]{0}', space=vmem, size = 0x4000, scoped, tag = 'output window, operand 0']
    %11 = vsyncpa [#allocation3], 0
    %s12 = scalar_lea.sflag [#allocation3], 1
    %13 = vsyncpa %s12, 0
    %14 = vsyncpa [#allocation6], 0
    %s15 = scalar_lea.sflag [#allocation6], 1
    %16 = vsyncpa %s15, 0
    %17 = vsyncpa [#allocation9], 0
    %18 = vsyncpa [#allocation4], 0
    %s19 = scalar_lea.sflag [#allocation4], 1
    %20 = vsyncpa %s19, 0
    loop: start=0, step=1, limit=5
    $region2: #{tpu_custom_call.1} parent=1 // loop_pre_header
      _
    $region3: #{tpu_custom_call.1} parent=1 // loop_header
      %s22 = sphi 0, %s26
      %p23 = scmp.ge.s32.totalorder %s22, 5
      %s32 = sphi 0, %s34
      %s35 = sphi 0, %s32
      %s36 = sphi 0, %s35
      %s52 = sphi 0, %s36
      %s58 = sphi 0, %s60
      %s61 = sphi 0, %s58
      %s62 = sphi 0, %s61
      %s78 = sphi 0, %s62
      %s82 = sphi 0, %s82
      %s84 = sphi 0, %s82
      %s85 = sphi 0, %s84
      %s99 = sphi 0, %s85
      %s103 = sphi 0, %s103
      %s105 = sphi 0, %s103
      %s106 = sphi 0, %s105
      %s120 = sphi 0, %s106
      %s124 = sphi 0, %s124
      %s126 = sphi 0, %s124
      %s127 = sphi 0, %s126
      %s141 = sphi 0, %s127
      %s145 = sphi 0, %s145
      %s147 = sphi 0, %s145
      %s148 = sphi 0, %s147
      %s162 = sphi 0, %s148
      %s168 = sphi 0, %s170
      %s171 = sphi 0, %s168
      %s172 = sphi 0, %s171
      %s188 = sphi 0, %s172
    $region4: #{tpu_custom_call.1} parent=1 // loop_header_branch
      %25 = sbr.rel (%p23) target = $region8
    $region5: #{tpu_custom_call.1} parent=1 // loop_body
      %s27 = ssub.s32 %s22, 1
      %s28 = ssub.s32 %s22, 2
      %s29 = sadd.s32 %s22, 1
      %s30 = ssub.s32 %s22, %s29
      %p31 = scmp.eq.s32.totalorder %s30, 0
      %s33 = sadd.s32 %s32, 1
      %s34 = scalar_select %p31, %s32, %s33
      %p37 = pneg %p31
      %p38 = scmp.eq.s32.totalorder %s22, 2
      %p39 = por %p37, %p38
      %p40 = scmp.ne.s32.totalorder %s32, %s35
      %p41 = scmp.eq.s32.totalorder %s22, 0
      %p42 = por %p40, %p41
      %p43 = scmp.ne.s32.totalorder %s32, %s35
      %p44 = scmp.eq.s32.totalorder %s27, 2
      %p45 = por %p43, %p44
      %p46 = scmp.ne.s32.totalorder %s35, %s36
      %p47 = scmp.eq.s32.totalorder %s27, 0
      %p48 = por %p46, %p47
      %p49 = scmp.ne.s32.totalorder %s35, %s36
      %p50 = scmp.eq.s32.totalorder %s28, 2
      %p51 = por %p49, %p50
      %p53 = scmp.ne.s32.totalorder %s36, %s52
      %p54 = scmp.eq.s32.totalorder %s28, 0
      %p55 = por %p53, %p54
      %s56 = ssub.s32 %s22, %s29
      %p57 = scmp.eq.s32.totalorder %s56, 0
      %s59 = sadd.s32 %s58, 1
      %s60 = scalar_select %p57, %s58, %s59
      %p63 = pneg %p57
      %p64 = scmp.eq.s32.totalorder %s22, 2
      %p65 = por %p63, %p64
      %p66 = scmp.ne.s32.totalorder %s58, %s61
      %p67 = scmp.eq.s32.totalorder %s22, 0
      %p68 = por %p66, %p67
      %p69 = scmp.ne.s32.totalorder %s58, %s61
      %p70 = scmp.eq.s32.totalorder %s27, 2
      %p71 = por %p69, %p70
      %p72 = scmp.ne.s32.totalorder %s61, %s62
      %p73 = scmp.eq.s32.totalorder %s27, 0
      %p74 = por %p72, %p73
      %p75 = scmp.ne.s32.totalorder %s61, %s62
      %p76 = scmp.eq.s32.totalorder %s28, 2
      %p77 = por %p75, %p76
      %p79 = scmp.ne.s32.totalorder %s62, %s78
      %p80 = scmp.eq.s32.totalorder %s28, 0
      %p81 = por %p79, %p80
      %s83 = sadd.s32 %s82, 1
      %p86 = scmp.eq.s32.totalorder %s22, 2
      %p87 = scmp.ne.s32.totalorder %s82, %s84
      %p88 = scmp.eq.s32.totalorder %s22, 0
      %p89 = por %p87, %p88
      %p90 = scmp.ne.s32.totalorder %s82, %s84
      %p91 = scmp.eq.s32.totalorder %s27, 2
      %p92 = por %p90, %p91
      %p93 = scmp.ne.s32.totalorder %s84, %s85
      %p94 = scmp.eq.s32.totalorder %s27, 0
      %p95 = por %p93, %p94
      %p96 = scmp.ne.s32.totalorder %s84, %s85
      %p97 = scmp.eq.s32.totalorder %s28, 2
      %p98 = por %p96, %p97
      %p100 = scmp.ne.s32.totalorder %s85, %s99
      %p101 = scmp.eq.s32.totalorder %s28, 0
      %p102 = por %p100, %p101
      %s104 = sadd.s32 %s103, 1
      %p107 = scmp.eq.s32.totalorder %s22, 2
      %p108 = scmp.ne.s32.totalorder %s103, %s105
      %p109 = scmp.eq.s32.totalorder %s22, 0
      %p110 = por %p108, %p109
      %p111 = scmp.ne.s32.totalorder %s103, %s105
      %p112 = scmp.eq.s32.totalorder %s27, 2
      %p113 = por %p111, %p112
      %p114 = scmp.ne.s32.totalorder %s105, %s106
      %p115 = scmp.eq.s32.totalorder %s27, 0
      %p116 = por %p114, %p115
      %p117 = scmp.ne.s32.totalorder %s105, %s106
      %p118 = scmp.eq.s32.totalorder %s28, 2
      %p119 = por %p117, %p118
      %p121 = scmp.ne.s32.totalorder %s106, %s120
      %p122 = scmp.eq.s32.totalorder %s28, 0
      %p123 = por %p121, %p122
      %s125 = sadd.s32 %s124, 1
      %p128 = scmp.eq.s32.totalorder %s22, 2
      %p129 = scmp.ne.s32.totalorder %s124, %s126
      %p130 = scmp.eq.s32.totalorder %s22, 0
      %p131 = por %p129, %p130
      %p132 = scmp.ne.s32.totalorder %s124, %s126
      %p133 = scmp.eq.s32.totalorder %s27, 2
      %p134 = por %p132, %p133
      %p135 = scmp.ne.s32.totalorder %s126, %s127
      %p136 = scmp.eq.s32.totalorder %s27, 0
      %p137 = por %p135, %p136
      %p138 = scmp.ne.s32.totalorder %s126, %s127
      %p139 = scmp.eq.s32.totalorder %s28, 2
      %p140 = por %p138, %p139
      %p142 = scmp.ne.s32.totalorder %s127, %s141
      %p143 = scmp.eq.s32.totalorder %s28, 0
      %p144 = por %p142, %p143
      %s146 = sadd.s32 %s145, 1
      %p149 = scmp.eq.s32.totalorder %s22, 2
      %p150 = scmp.ne.s32.totalorder %s145, %s147
      %p151 = scmp.eq.s32.totalorder %s22, 0
      %p152 = por %p150, %p151
      %p153 = scmp.ne.s32.totalorder %s145, %s147
      %p154 = scmp.eq.s32.totalorder %s27, 2
      %p155 = por %p153, %p154
      %p156 = scmp.ne.s32.totalorder %s147, %s148
      %p157 = scmp.eq.s32.totalorder %s27, 0
      %p158 = por %p156, %p157
      %p159 = scmp.ne.s32.totalorder %s147, %s148
      %p160 = scmp.eq.s32.totalorder %s28, 2
      %p161 = por %p159, %p160
      %p163 = scmp.ne.s32.totalorder %s148, %s162
      %p164 = scmp.eq.s32.totalorder %s28, 0
      %p165 = por %p163, %p164
      %s166 = ssub.s32 %s22, %s29
      %p167 = scmp.eq.s32.totalorder %s166, 0
      %s169 = sadd.s32 %s168, 1
      %s170 = scalar_select %p167, %s168, %s169
      %p173 = pneg %p167
      %p174 = scmp.eq.s32.totalorder %s22, 2
      %p175 = por %p173, %p174
      %p176 = scmp.ne.s32.totalorder %s168, %s171
      %p177 = scmp.eq.s32.totalorder %s22, 0
      %p178 = por %p176, %p177
      %p179 = scmp.ne.s32.totalorder %s168, %s171
      %p180 = scmp.eq.s32.totalorder %s27, 2
      %p181 = por %p179, %p180
      %p182 = scmp.ne.s32.totalorder %s171, %s172
      %p183 = scmp.eq.s32.totalorder %s27, 0
      %p184 = por %p182, %p183
      %p185 = scmp.ne.s32.totalorder %s171, %s172
      %p186 = scmp.eq.s32.totalorder %s28, 2
      %p187 = por %p185, %p186
      %p189 = scmp.ne.s32.totalorder %s172, %s188
      %p190 = scmp.eq.s32.totalorder %s28, 0
      %p191 = por %p189, %p190
      %p192 = scmp.le.s32.totalorder 1, %s22
      %p193 = scmp.lt.s32.totalorder %s22, 4
      %p194 = pnand %p192, %p193
      %p195 = pneg %p194
      // Predicated region
      $region9: #{tpu_custom_call.1} parent=5 // pred_check
        _
      $region10: #{tpu_custom_call.1} parent=5 // pred_check_branch
        %197 = sbr.rel (%p194) target = $region12
      $region11: #{tpu_custom_call.1} parent=5 // pred_region
        %s198 = ssub.s32 %s22, 1
        // Predicated region
        $region13: #{tpu_custom_call.1} parent=11 // pred_check
          %p199 = pneg %p95
        $region14: #{tpu_custom_call.1} parent=11 // pred_check_branch
          %201 = sbr.rel (%p199) target = $region16
        $region15: #{tpu_custom_call.1} parent=11 // pred_region
          %s203 = ssub.s32 2048, 2048
          %204 = vsyncadd [#allocation6], %s203
          %s205 = sshll.u32 [#allocation7], 4
          %s206 = int_to_ptr.vmem [resolvable:$true] %s205
          %211 = dma.hbm_to_vmem [thread:$0]  %s2, 2048, %s206, [#allocation6], 64, 64, 4
        $region16: #{tpu_custom_call.1} parent=11 // pred_fallthru
          _
        // Predicated region
        $region17: #{tpu_custom_call.1} parent=11 // pred_check
          %p212 = pneg %p116
        $region18: #{tpu_custom_call.1} parent=11 // pred_check_branch
          %214 = sbr.rel (%p212) target = $region20
        $region19: #{tpu_custom_call.1} parent=11 // pred_region
          _
        $region20: #{tpu_custom_call.1} parent=11 // pred_fallthru
          _
        // Predicated region
        $region21: #{tpu_custom_call.1} parent=11 // pred_check
          %p215 = pneg %p137
        $region22: #{tpu_custom_call.1} parent=11 // pred_check_branch
          %217 = sbr.rel (%p215) target = $region24
        $region23: #{tpu_custom_call.1} parent=11 // pred_region
          %s219 = ssub.s32 1024, 1024
          %220 = vsyncadd [#allocation9], %s219
          %s221 = sshll.u32 [#allocation8], 4
          %s222 = int_to_ptr.vmem [resolvable:$true] %s221
          %227 = dma.hbm_to_vmem [thread:$0]  %s4, 1024, %s222, [#allocation9], 64, 64, 4
        $region24: #{tpu_custom_call.1} parent=11 // pred_fallthru
          _
        // Predicated region
        $region25: #{tpu_custom_call.1} parent=11 // pred_check
          %p228 = pneg %p158
        $region26: #{tpu_custom_call.1} parent=11 // pred_check_branch
          %230 = sbr.rel (%p228) target = $region28
        $region27: #{tpu_custom_call.1} parent=11 // pred_region
          _
        $region28: #{tpu_custom_call.1} parent=11 // pred_fallthru
          _
      $region12: #{tpu_custom_call.1} parent=5 // pred_fallthru
        _
      %p231 = scmp.lt.s32.totalorder %s22, 3
      // Predicated region
      $region29: #{tpu_custom_call.1} parent=5 // pred_check
        %p232 = pneg %p231
      $region30: #{tpu_custom_call.1} parent=5 // pred_check_branch
        %234 = sbr.rel (%p232) target = $region32
      $region31: #{tpu_custom_call.1} parent=5 // pred_region
        // Predicated region
        $region33: #{tpu_custom_call.1} parent=31 // pred_check
          %p235 = pneg %p42
        $region34: #{tpu_custom_call.1} parent=31 // pred_check_branch
          %237 = sbr.rel (%p235) target = $region36
        $region35: #{tpu_custom_call.1} parent=31 // pred_region
          %s238 = sand.u32 %s32, 1
          %s239 = scalar_lea.sflag [#allocation3], %s238
          %s240 = sand.u32 %s32, 1
          %s241 = smul.addr %s240, 16
          %s242 = scalar_lea.vmem [#allocation2], %s241
          %s243 = smul.u32 2, %s22
          %s245 = ssub.s32 256, 256
          %246 = vsyncadd %s239, %s245
          %s247 = smul.addr %s243, 128
          %s248 = scalar_lea.hbm %s0, %s247
          %s249 = sshll.u32 %s242, 4
          %s250 = int_to_ptr.vmem [resolvable:$true] %s249
          %255 = dma.hbm_to_vmem [thread:$0]  %s248, 256, %s250, %s239, 128, 128, 8
        $region36: #{tpu_custom_call.1} parent=31 // pred_fallthru
          _
        // Predicated region
        $region37: #{tpu_custom_call.1} parent=31 // pred_check
          %p256 = pneg %p68
        $region38: #{tpu_custom_call.1} parent=31 // pred_check_branch
          %258 = sbr.rel (%p256) target = $region40
        $region39: #{tpu_custom_call.1} parent=31 // pred_region
          %s259 = sand.u32 %s22, 1
          %s260 = scalar_lea.sflag [#allocation6], %s259
          %s261 = sand.u32 %s58, 1
          %s262 = smul.addr %s261, 16
          %s263 = scalar_lea.vmem [#allocation5], %s262
          %s264 = smul.u32 2, %s22
          %s266 = ssub.s32 256, 256
          %267 = vsyncadd %s260, %s266
          %s268 = smul.addr %s264, 128
          %s269 = scalar_lea.hbm %s1, %s268
          %s270 = sshll.u32 %s263, 4
          %s271 = int_to_ptr.vmem [resolvable:$true] %s270
          %276 = dma.hbm_to_vmem [thread:$0]  %s269, 256, %s271, %s260, 128, 128, 8
        $region40: #{tpu_custom_call.1} parent=31 // pred_fallthru
          _
      $region32: #{tpu_custom_call.1} parent=5 // pred_fallthru
        _
      %p277 = scmp.le.s32.totalorder 1, %s22
      %p278 = scmp.lt.s32.totalorder %s22, 4
      %p279 = pnand %p277, %p278
      %p280 = pneg %p279
      // Predicated region
      $region41: #{tpu_custom_call.1} parent=5 // pred_check
        _
      $region42: #{tpu_custom_call.1} parent=5 // pred_check_branch
        %282 = sbr.rel (%p279) target = $region44
      $region43: #{tpu_custom_call.1} parent=5 // pred_region
        %s283 = ssub.s32 %s22, 1
        %s284 = sand.u32 %s35, 1
        %s285 = scalar_lea.sflag [#allocation3], %s284
        %s286 = sand.u32 %s35, 1
        %s287 = smul.addr %s286, 16
        %s288 = scalar_lea.vmem [#allocation2], %s287
        // Predicated region
        $region45: #{tpu_custom_call.1} parent=43 // pred_check
          %p289 = pneg %p48
        $region46: #{tpu_custom_call.1} parent=43 // pred_check_branch
          %291 = sbr.rel (%p289) target = $region48
        $region47: #{tpu_custom_call.1} parent=43 // pred_region
          %292 = dma.done %s285, 256
        $region48: #{tpu_custom_call.1} parent=43 // pred_fallthru
          _
        %s293 = sand.u32 %s27, 1
        %s294 = scalar_lea.sflag [#allocation6], %s293
        %s295 = sand.u32 %s61, 1
        %s296 = smul.addr %s295, 16
        %s297 = scalar_lea.vmem [#allocation5], %s296
        // Predicated region
        $region49: #{tpu_custom_call.1} parent=43 // pred_check
          %p298 = pneg %p74
        $region50: #{tpu_custom_call.1} parent=43 // pred_check_branch
          %300 = sbr.rel (%p298) target = $region52
        $region51: #{tpu_custom_call.1} parent=43 // pred_region
          %301 = dma.done %s294, 256
        $region52: #{tpu_custom_call.1} parent=43 // pred_fallthru
          _
        // Predicated region
        $region53: #{tpu_custom_call.1} parent=43 // pred_check
          %p302 = pneg %p95
        $region54: #{tpu_custom_call.1} parent=43 // pred_check_branch
          %304 = sbr.rel (%p302) target = $region56
        $region55: #{tpu_custom_call.1} parent=43 // pred_region
          %305 = dma.done [#allocation6], 2048
        $region56: #{tpu_custom_call.1} parent=43 // pred_fallthru
          _
        // Predicated region
        $region57: #{tpu_custom_call.1} parent=43 // pred_check
          %p306 = pneg %p137
        $region58: #{tpu_custom_call.1} parent=43 // pred_check_branch
          %308 = sbr.rel (%p306) target = $region60
        $region59: #{tpu_custom_call.1} parent=43 // pred_region
          %309 = dma.done [#allocation9], 1024
        $region60: #{tpu_custom_call.1} parent=43 // pred_fallthru
          _
        %s310 = sand.u32 %s35, 1
        %s311 = scalar_lea.sflag [#allocation3], %s310
        %s312 = sand.u32 %s35, 1
        %s313 = smul.addr %s312, 16
        %s314 = scalar_lea.vmem [#allocation2], %s313
        %p315 = pneg %p48
        %p316 = pneg %p45
        %s317 = sand.u32 %s27, 1
        %s318 = scalar_lea.sflag [#allocation6], %s317
        %s319 = sand.u32 %s61, 1
        %s320 = smul.addr %s319, 16
        %s321 = scalar_lea.vmem [#allocation5], %s320
        %p322 = pneg %p74
        %p323 = pneg %p71
        %p324 = pneg %p95
        %p325 = pneg %p92
        %p326 = pneg %p116
        %p327 = pneg %p113
        %p328 = pneg %p137
        %p329 = pneg %p134
        %p330 = pneg %p158
        %p331 = pneg %p155
        %p332 = pneg %p184
        %p333 = pneg %p181
        %s334 = sand.u32 %s171, 1
        %s335 = scalar_lea.sflag [#allocation4], %s334
        %s336 = sand.u32 %s171, 1
        %s337 = smul.addr %s336, 16
        %s338 = scalar_lea.vmem [#allocation10], %s337
        %s339 = smul.u32 2, %s27
        %s340 = smul.u32 2, %s27
        %s341 = smul.u32 2, %s27
        %v343 = vld [vmem:[%s288] sm:$0xff]
        %v344 = vld [vmem:[%s288 + $0x8] sm:$0xff]
        %v345 = vpack.c.bf16 %v344, %v343
        %v346 = vld [vmem:[#allocation7] sm:$0xf]
        %v347 = vld [vmem:[#allocation7 + $0x4] sm:$0xf]
        %v348 = vld [vmem:[#allocation7 + $0x8] sm:$0xf]
        %v349 = vld [vmem:[#allocation7 + $0xc] sm:$0xf]
        %v350 = vld [vmem:[#allocation7 + $0x10] sm:$0xf]
        %v351 = vld [vmem:[#allocation7 + $0x14] sm:$0xf]
        %v352 = vld [vmem:[#allocation7 + $0x18] sm:$0xf]
        %v353 = vld [vmem:[#allocation7 + $0x1c] sm:$0xf]
        %v354 = vld [vmem:[#allocation7 + $0x20] sm:$0xf]
        %v355 = vld [vmem:[#allocation7 + $0x24] sm:$0xf]
        %v356 = vld [vmem:[#allocation7 + $0x28] sm:$0xf]
        %v357 = vld [vmem:[#allocation7 + $0x2c] sm:$0xf]
        %v358 = vld [vmem:[#allocation7 + $0x30] sm:$0xf]
        %v359 = vld [vmem:[#allocation7 + $0x34] sm:$0xf]
        %v360 = vld [vmem:[#allocation7 + $0x38] sm:$0xf]
        %v361 = vld [vmem:[#allocation7 + $0x3c] sm:$0xf]
        %v362 = vld [vmem:[%s3] sm:$0x1]
        %v364 = vlaneseq
        %v365 = vshrl.u32 %v364, 7
        %v366 = vsub.s32 0, %v365
        %v367 = vrot.slane %v362, %v366
        %v385 = vunpack.c.l.b16 %v346
        %v386 = vunpack.c.l.b16 %v347
        %v387 = vunpack.c.l.b16 %v348
        %v388 = vunpack.c.l.b16 %v349
        %v389 = vunpack.c.l.b16 %v350
        %v390 = vunpack.c.l.b16 %v351
        %v391 = vunpack.c.l.b16 %v352
        %v392 = vunpack.c.l.b16 %v353
        %v393 = vunpack.c.l.b16 %v354
        %v394 = vunpack.c.l.b16 %v355
        %v395 = vunpack.c.l.b16 %v356
        %v396 = vunpack.c.l.b16 %v357
        %v397 = vunpack.c.l.b16 %v358
        %v398 = vunpack.c.l.b16 %v359
        %v399 = vunpack.c.l.b16 %v360
        %v400 = vunpack.c.l.b16 %v361
        %v401 = vpack.c.b16 %v386, %v385
        %v402 = vpack.c.b16 %v388, %v387
        %v403 = vpack.c.b16 %v390, %v389
        %v404 = vpack.c.b16 %v392, %v391
        %v405 = vpack.c.b16 %v394, %v393
        %v406 = vpack.c.b16 %v396, %v395
        %v407 = vpack.c.b16 %v398, %v397
        %v408 = vpack.c.b16 %v400, %v399
        %417 = vmatprep.subr.bf16.mxu0 0
        %418 = vmatpush1.bf16.msra.mxu0 %v401
        %419 = vmatprep.subr.bf16.mxu0 0
        %420 = vmatpush1.bf16.msra.mxu0 %v402
        %421 = vmatprep.subr.bf16.mxu0 0
        %422 = vmatpush1.bf16.msra.mxu0 %v403
        %423 = vmatprep.subr.bf16.mxu0 0
        %424 = vmatpush1.bf16.msra.mxu0 %v404
        %425 = vmatprep.subr.bf16.mxu0 0
        %426 = vmatpush1.bf16.msra.mxu0 %v405
        %427 = vmatprep.subr.bf16.mxu0 0
        %428 = vmatpush1.bf16.msra.mxu0 %v406
        %429 = vmatprep.subr.bf16.mxu0 0
        %430 = vmatpush1.bf16.msra.mxu0 %v407
        %431 = vmatprep.subr.bf16.mxu0 0
        %432 = vmatpush1.bf16.msra.mxu0 %v408
        %433 = vmatprep.subr.bf16.mxu0 0
        %434 = vmatpush1.bf16.msra.mxu0 0
        %435 = vmatprep.subr.bf16.mxu0 0
        %436 = vmatpush1.bf16.msra.mxu0 0
        %437 = vmatprep.subr.bf16.mxu0 0
        %438 = vmatpush1.bf16.msra.mxu0 0
        %439 = vmatprep.subr.bf16.mxu0 0
        %440 = vmatpush1.bf16.msra.mxu0 0
        %441 = vmatprep.subr.bf16.mxu0 0
        %442 = vmatpush1.bf16.msra.mxu0 0
        %443 = vmatprep.subr.bf16.mxu0 0
        %444 = vmatpush1.bf16.msra.mxu0 0
        %445 = vmatprep.subr.bf16.mxu0 0
        %446 = vmatpush1.bf16.msra.mxu0 0
        %447 = vmatprep.subr.bf16.mxu0 0
        %448 = vmatpush1.bf16.msra.mxu0 0
        %449 = vmatprep.mubr.bf16.mxu0 0
        %450 = vmatmul.mubr.bf16.gmra.mrb[0].mxu0 %v345
        %v451 = vpop.f32.mrb[0].mxu0
        %v452 = vadd.f32 %v367, %v451
        %v453 = vpop.f32.mrb[0].mxu0
        %v454 = vpop.f32.mrb[0].mxu0
        %v455 = vadd.f32 %v367, %v454
        %v456 = vpop.f32.mrb[0].mxu0
        %457 = vdwg.mxu0
        %v458 = vmax.f32 %v452, 0.0
        %v459 = vmax.f32 %v455, 0.0
        %v460 = vpack.c.bf16 %v459, %v458
        %s461 = scalar_lea.vmem [#allocation7], 64
        %v462 = vld [vmem:[%s461] sm:$0xf]
        %v463 = vld [vmem:[%s461 + $0x4] sm:$0xf]
        %v464 = vld [vmem:[%s461 + $0x8] sm:$0xf]
        %v465 = vld [vmem:[%s461 + $0xc] sm:$0xf]
        %v466 = vld [vmem:[%s461 + $0x10] sm:$0xf]
        %v467 = vld [vmem:[%s461 + $0x14] sm:$0xf]
        %v468 = vld [vmem:[%s461 + $0x18] sm:$0xf]
        %v469 = vld [vmem:[%s461 + $0x1c] sm:$0xf]
        %v470 = vld [vmem:[%s461 + $0x20] sm:$0xf]
        %v471 = vld [vmem:[%s461 + $0x24] sm:$0xf]
        %v472 = vld [vmem:[%s461 + $0x28] sm:$0xf]
        %v473 = vld [vmem:[%s461 + $0x2c] sm:$0xf]
        %v474 = vld [vmem:[%s461 + $0x30] sm:$0xf]
        %v475 = vld [vmem:[%s461 + $0x34] sm:$0xf]
        %v476 = vld [vmem:[%s461 + $0x38] sm:$0xf]
        %v477 = vld [vmem:[%s461 + $0x3c] sm:$0xf]
        %s478 = scalar_lea.vmem %s3, 1
        %v479 = vld [vmem:[%s478] sm:$0x1]
        %v481 = vlaneseq
        %v482 = vshrl.u32 %v481, 7
        %v483 = vsub.s32 0, %v482
        %v484 = vrot.slane %v479, %v483
        %v502 = vunpack.c.l.b16 %v462
        %v503 = vunpack.c.l.b16 %v463
        %v504 = vunpack.c.l.b16 %v464
        %v505 = vunpack.c.l.b16 %v465
        %v506 = vunpack.c.l.b16 %v466
        %v507 = vunpack.c.l.b16 %v467
        %v508 = vunpack.c.l.b16 %v468
        %v509 = vunpack.c.l.b16 %v469
        %v510 = vunpack.c.l.b16 %v470
        %v511 = vunpack.c.l.b16 %v471
        %v512 = vunpack.c.l.b16 %v472
        %v513 = vunpack.c.l.b16 %v473
        %v514 = vunpack.c.l.b16 %v474
        %v515 = vunpack.c.l.b16 %v475
        %v516 = vunpack.c.l.b16 %v476
        %v517 = vunpack.c.l.b16 %v477
        %v518 = vpack.c.b16 %v503, %v502
        %v519 = vpack.c.b16 %v505, %v504
        %v520 = vpack.c.b16 %v507, %v506
        %v521 = vpack.c.b16 %v509, %v508
        %v522 = vpack.c.b16 %v511, %v510
        %v523 = vpack.c.b16 %v513, %v512
        %v524 = vpack.c.b16 %v515, %v514
        %v525 = vpack.c.b16 %v517, %v516
        %534 = vmatprep.subr.bf16.mxu0 0
        %535 = vmatpush1.bf16.msra.mxu0 %v518
        %536 = vmatprep.subr.bf16.mxu0 0
        %537 = vmatpush1.bf16.msra.mxu0 %v519
        %538 = vmatprep.subr.bf16.mxu0 0
        %539 = vmatpush1.bf16.msra.mxu0 %v520
        %540 = vmatprep.subr.bf16.mxu0 0
        %541 = vmatpush1.bf16.msra.mxu0 %v521
        %542 = vmatprep.subr.bf16.mxu0 0
        %543 = vmatpush1.bf16.msra.mxu0 %v522
        %544 = vmatprep.subr.bf16.mxu0 0
        %545 = vmatpush1.bf16.msra.mxu0 %v523
        %546 = vmatprep.subr.bf16.mxu0 0
        %547 = vmatpush1.bf16.msra.mxu0 %v524
        %548 = vmatprep.subr.bf16.mxu0 0
        %549 = vmatpush1.bf16.msra.mxu0 %v525
        %550 = vmatprep.subr.bf16.mxu0 0
        %551 = vmatpush1.bf16.msra.mxu0 0
        %552 = vmatprep.subr.bf16.mxu0 0
        %553 = vmatpush1.bf16.msra.mxu0 0
        %554 = vmatprep.subr.bf16.mxu0 0
        %555 = vmatpush1.bf16.msra.mxu0 0
        %556 = vmatprep.subr.bf16.mxu0 0
        %557 = vmatpush1.bf16.msra.mxu0 0
        %558 = vmatprep.subr.bf16.mxu0 0
        %559 = vmatpush1.bf16.msra.mxu0 0
        %560 = vmatprep.subr.bf16.mxu0 0
        %561 = vmatpush1.bf16.msra.mxu0 0
        %562 = vmatprep.subr.bf16.mxu0 0
        %563 = vmatpush1.bf16.msra.mxu0 0
        %564 = vmatprep.subr.bf16.mxu0 0
        %565 = vmatpush1.bf16.msra.mxu0 0
        %566 = vmatprep.mubr.bf16.mxu0 0
        %567 = vmatmul.mubr.bf16.gmra.mrb[0].mxu0 %v460
        %v568 = vpop.f32.mrb[0].mxu0
        %v569 = vadd.f32 %v484, %v568
        %v570 = vpop.f32.mrb[0].mxu0
        %v571 = vpop.f32.mrb[0].mxu0
        %v572 = vadd.f32 %v484, %v571
        %v573 = vpop.f32.mrb[0].mxu0
        %574 = vdwg.mxu0
        %v575 = vld [vmem:[%s297] sm:$0xff]
        %v576 = vld [vmem:[%s297 + $0x8] sm:$0xff]
        %v577 = vpack.c.bf16 %v576, %v575
        %v578 = vld [vmem:[#allocation8] sm:$0xf]
        %v579 = vld [vmem:[#allocation8 + $0x4] sm:$0xf]
        %v580 = vld [vmem:[#allocation8 + $0x8] sm:$0xf]
        %v581 = vld [vmem:[#allocation8 + $0xc] sm:$0xf]
        %v582 = vld [vmem:[#allocation8 + $0x10] sm:$0xf]
        %v583 = vld [vmem:[#allocation8 + $0x14] sm:$0xf]
        %v584 = vld [vmem:[#allocation8 + $0x18] sm:$0xf]
        %v585 = vld [vmem:[#allocation8 + $0x1c] sm:$0xf]
        %v586 = vld [vmem:[#allocation8 + $0x20] sm:$0xf]
        %v587 = vld [vmem:[#allocation8 + $0x24] sm:$0xf]
        %v588 = vld [vmem:[#allocation8 + $0x28] sm:$0xf]
        %v589 = vld [vmem:[#allocation8 + $0x2c] sm:$0xf]
        %v590 = vld [vmem:[#allocation8 + $0x30] sm:$0xf]
        %v591 = vld [vmem:[#allocation8 + $0x34] sm:$0xf]
        %v592 = vld [vmem:[#allocation8 + $0x38] sm:$0xf]
        %v593 = vld [vmem:[#allocation8 + $0x3c] sm:$0xf]
        %v594 = vld [vmem:[%s5] sm:$0x1]
        %v596 = vlaneseq
        %v597 = vshrl.u32 %v596, 7
        %v598 = vsub.s32 0, %v597
        %v599 = vrot.slane %v594, %v598
        %v617 = vunpack.c.l.b16 %v578
        %v618 = vunpack.c.l.b16 %v579
        %v619 = vunpack.c.l.b16 %v580
        %v620 = vunpack.c.l.b16 %v581
        %v621 = vunpack.c.l.b16 %v582
        %v622 = vunpack.c.l.b16 %v583
        %v623 = vunpack.c.l.b16 %v584
        %v624 = vunpack.c.l.b16 %v585
        %v625 = vunpack.c.l.b16 %v586
        %v626 = vunpack.c.l.b16 %v587
        %v627 = vunpack.c.l.b16 %v588
        %v628 = vunpack.c.l.b16 %v589
        %v629 = vunpack.c.l.b16 %v590
        %v630 = vunpack.c.l.b16 %v591
        %v631 = vunpack.c.l.b16 %v592
        %v632 = vunpack.c.l.b16 %v593
        %v633 = vpack.c.b16 %v618, %v617
        %v634 = vpack.c.b16 %v620, %v619
        %v635 = vpack.c.b16 %v622, %v621
        %v636 = vpack.c.b16 %v624, %v623
        %v637 = vpack.c.b16 %v626, %v625
        %v638 = vpack.c.b16 %v628, %v627
        %v639 = vpack.c.b16 %v630, %v629
        %v640 = vpack.c.b16 %v632, %v631
        %649 = vmatprep.subr.bf16.mxu0 0
        %650 = vmatpush1.bf16.msra.mxu0 %v633
        %651 = vmatprep.subr.bf16.mxu0 0
        %652 = vmatpush1.bf16.msra.mxu0 %v634
        %653 = vmatprep.subr.bf16.mxu0 0
        %654 = vmatpush1.bf16.msra.mxu0 %v635
        %655 = vmatprep.subr.bf16.mxu0 0
        %656 = vmatpush1.bf16.msra.mxu0 %v636
        %657 = vmatprep.subr.bf16.mxu0 0
        %658 = vmatpush1.bf16.msra.mxu0 %v637
        %659 = vmatprep.subr.bf16.mxu0 0
        %660 = vmatpush1.bf16.msra.mxu0 %v638
        %661 = vmatprep.subr.bf16.mxu0 0
        %662 = vmatpush1.bf16.msra.mxu0 %v639
        %663 = vmatprep.subr.bf16.mxu0 0
        %664 = vmatpush1.bf16.msra.mxu0 %v640
        %665 = vmatprep.subr.bf16.mxu0 0
        %666 = vmatpush1.bf16.msra.mxu0 0
        %667 = vmatprep.subr.bf16.mxu0 0
        %668 = vmatpush1.bf16.msra.mxu0 0
        %669 = vmatprep.subr.bf16.mxu0 0
        %670 = vmatpush1.bf16.msra.mxu0 0
        %671 = vmatprep.subr.bf16.mxu0 0
        %672 = vmatpush1.bf16.msra.mxu0 0
        %673 = vmatprep.subr.bf16.mxu0 0
        %674 = vmatpush1.bf16.msra.mxu0 0
        %675 = vmatprep.subr.bf16.mxu0 0
        %676 = vmatpush1.bf16.msra.mxu0 0
        %677 = vmatprep.subr.bf16.mxu0 0
        %678 = vmatpush1.bf16.msra.mxu0 0
        %679 = vmatprep.subr.bf16.mxu0 0
        %680 = vmatpush1.bf16.msra.mxu0 0
        %681 = vmatprep.mubr.bf16.mxu0 0
        %682 = vmatmul.mubr.bf16.gmra.mrb[0].mxu0 %v577
        %v683 = vpop.f32.mrb[0].mxu0
        %v684 = vadd.f32 %v599, %v683
        %v685 = vpop.f32.mrb[0].mxu0
        %v686 = vpop.f32.mrb[0].mxu0
        %v687 = vadd.f32 %v599, %v686
        %v688 = vpop.f32.mrb[0].mxu0
        %689 = vdwg.mxu0
        %v690 = vmax.f32 %v684, 0.0
        %v691 = vmax.f32 %v687, 0.0
        %v692 = vadd.f32 %v569, %v690
        %v693 = vadd.f32 %v572, %v691
        %694 = vst [vmem:[%s338] sm:$0xff] %v692
        %695 = vst [vmem:[%s338 + $0x8] sm:$0xff] %v693
        %s696 = sand.u32 %s171, 1
        %s697 = scalar_lea.sflag [#allocation4], %s696
        %s698 = sand.u32 %s171, 1
        %s699 = smul.addr %s698, 16
        %s700 = scalar_lea.vmem [#allocation10], %s699
        // Predicated region
        $region61: #{tpu_custom_call.1} parent=43 // pred_check
          %p701 = pneg %p181
        $region62: #{tpu_custom_call.1} parent=43 // pred_check_branch
          %703 = sbr.rel (%p701) target = $region64
        $region63: #{tpu_custom_call.1} parent=43 // pred_region
          %s704 = smul.u32 2, %s27
          %s706 = ssub.s32 256, 256
          %707 = vsyncadd %s697, %s706
          %s708 = smul.addr %s704, 128
          %s709 = scalar_lea.hbm %s6, %s708
          %s710 = sshll.u32 %s700, 4
          %s711 = int_to_ptr.vmem [resolvable:$true] %s710
          %716 = dma.vmem_to_hbm [thread:$0]  %s711, 256, %s709, %s697, 128, 128, 8
        $region64: #{tpu_custom_call.1} parent=43 // pred_fallthru
          _
      $region44: #{tpu_custom_call.1} parent=5 // pred_fallthru
        _
      %p717 = scmp.le.s32.totalorder 2, %s22
      // Predicated region
      $region65: #{tpu_custom_call.1} parent=5 // pred_check
        %p718 = pneg %p717
      $region66: #{tpu_custom_call.1} parent=5 // pred_check_branch
        %720 = sbr.rel (%p718) target = $region68
      $region67: #{tpu_custom_call.1} parent=5 // pred_region
        %s721 = ssub.s32 %s22, 2
        // Predicated region
        $region69: #{tpu_custom_call.1} parent=67 // pred_check
          %p722 = pneg %p187
        $region70: #{tpu_custom_call.1} parent=67 // pred_check_branch
          %724 = sbr.rel (%p722) target = $region72
        $region71: #{tpu_custom_call.1} parent=67 // pred_region
          %s725 = sand.u32 %s172, 1
          %s726 = scalar_lea.sflag [#allocation4], %s725
          %s727 = sand.u32 %s172, 1
          %s728 = smul.addr %s727, 16
          %s729 = scalar_lea.vmem [#allocation10], %s728
          %730 = dma.done %s726, 256
        $region72: #{tpu_custom_call.1} parent=67 // pred_fallthru
          _
      $region68: #{tpu_custom_call.1} parent=5 // pred_fallthru
        _
    $region6: #{tpu_custom_call.1} parent=1 // loop_footer
      %s26 = sadd.s32 1, %s22
    $region7: #{tpu_custom_call.1} parent=1 // loop_footer_branch
      %21 = sbr.rel target = $region3
    $region8: #{tpu_custom_call.1} parent=1 // loop_exit
      _
    %731 = vsyncpa [#allocation3], 1
    %s732 = scalar_lea.sflag [#allocation3], 1
    %733 = vsyncpa %s732, 1
    %734 = vsyncpa [#allocation6], 1
    %s735 = scalar_lea.sflag [#allocation6], 1
    %736 = vsyncpa %s735, 1
    %737 = vsyncpa [#allocation9], 1
    %738 = vsyncpa [#allocation4], 1
    %s739 = scalar_lea.sflag [#allocation4], 1
    %740 = vsyncpa %s739, 1

// kernel: tpu_custom_call.1
$region0: #{tpu_custom_call.1}
  #allocation0 [shape = 'u32[]', space=smem, size = 0x4, offset = 0x4, fixed_abs, tag = 'smem constant byte address 0x4 - core index']
  #allocation1 [shape = 'u32[144,128]{1,0:T(1,128)}', space=vmem, size = 0x12000, scoped, tag = 'internal scratch']
  %s0 = inlined_call_operand.hbm [shape: f32[48,128], index: 0, kind: input, shape index: {}]
  %s1 = inlined_call_operand.hbm [shape: f32[48,128], index: 1, kind: input, shape index: {}]
  %s2 = inlined_call_operand.hbm [shape: bf16[2,128,128], index: 2, kind: input, shape index: {}]
  %s3 = inlined_call_operand.vmem [shape: f32[2,1,128], index: 3, kind: input, shape index: {}]
  %s4 = inlined_call_operand.hbm [shape: bf16[128,128], index: 4, kind: input, shape index: {}]
  %s5 = inlined_call_operand.vmem [shape: f32[1,128], index: 5, kind: input, shape index: {}]
  %s6 = inlined_call_operand.hbm [shape: f32[48,128], index: 6, kind: output, shape index: {}]
  %s7 = sld [smem:[#allocation0]]
  $region73: #{tpu_custom_call.1} parent=0
    _
  %s9 = ssub.s32 1, %s7
  %s10 = scalar_select 0, %s9, %s7
  $region1: #{tpu_custom_call.1} parent=0
    #allocation2 [shape = 'u8[16384]{0}', space=vmem, size = 0x4000, scoped, tag = 'input window, operand 0']
    #allocation3 [shape = 's32[2]{0}', space=sflag, size = 0x8, scoped, tag = 'scoped memory for tpu_custom_call.1']
    #allocation4 [shape = 's32[2]{0}', space=sflag, size = 0x8, scoped, tag = 'scoped memory for tpu_custom_call.1']
    #allocation5 [shape = 'u8[16384]{0}', space=vmem, size = 0x4000, scoped, tag = 'input window, operand 1']
    #allocation6 [shape = 's32[2]{0}', space=sflag, size = 0x8, scoped, tag = 'scoped memory for tpu_custom_call.1']
    #allocation7 [shape = 'u8[65536]{0}', space=vmem, size = 0x10000, scoped, tag = 'input window, operand 2, single buffered']
    #allocation8 [shape = 'u8[32768]{0}', space=vmem, size = 0x8000, scoped, tag = 'input window, operand 4, single buffered']
    #allocation9 [shape = 's32[1]{0}', space=sflag, size = 0x4, scoped, tag = 'scoped memory for tpu_custom_call.1']
    #allocation10 [shape = 'u8[16384]{0}', space=vmem, size = 0x4000, scoped, tag = 'output window, operand 0']
    %11 = vsyncpa [#allocation3], 0
    %s12 = scalar_lea.sflag [#allocation3], 1
    %13 = vsyncpa %s12, 0
    %14 = vsyncpa [#allocation6], 0
    %s15 = scalar_lea.sflag [#allocation6], 1
    %16 = vsyncpa %s15, 0
    %17 = vsyncpa [#allocation9], 0
    %18 = vsyncpa [#allocation4], 0
    %s19 = scalar_lea.sflag [#allocation4], 1
    %20 = vsyncpa %s19, 0
    loop: start=0, step=1, limit=5
    $region2: #{tpu_custom_call.1} parent=1 // loop_pre_header
      _
    $region3: #{tpu_custom_call.1} parent=1 // loop_header
      %s22 = sphi 0, %s26
      %p23 = scmp.ge.s32.totalorder %s22, 5
      %s32 = sphi 0, %s34
      %s35 = sphi 0, %s32
      %s36 = sphi 0, %s35
      %s52 = sphi 0, %s36
      %s58 = sphi 0, %s60
      %s61 = sphi 0, %s58
      %s62 = sphi 0, %s61
      %s78 = sphi 0, %s62
      %s82 = sphi 0, %s82
      %s84 = sphi 0, %s82
      %s85 = sphi 0, %s84
      %s99 = sphi 0, %s85
      %s103 = sphi 0, %s103
      %s105 = sphi 0, %s103
      %s106 = sphi 0, %s105
      %s120 = sphi 0, %s106
      %s124 = sphi 0, %s124
      %s126 = sphi 0, %s124
      %s127 = sphi 0, %s126
      %s141 = sphi 0, %s127
      %s145 = sphi 0, %s145
      %s147 = sphi 0, %s145
      %s148 = sphi 0, %s147
      %s162 = sphi 0, %s148
      %s168 = sphi 0, %s170
      %s171 = sphi 0, %s168
      %s172 = sphi 0, %s171
      %s188 = sphi 0, %s172
    $region4: #{tpu_custom_call.1} parent=1 // loop_header_branch
      %25 = sbr.rel (%p23) target = $region8
    $region5: #{tpu_custom_call.1} parent=1 // loop_body
      %s27 = ssub.s32 %s22, 1
      %s28 = ssub.s32 %s22, 2
      %s29 = sadd.s32 %s22, 1
      %s30 = ssub.s32 %s22, %s29
      %p31 = scmp.eq.s32.totalorder %s30, 0
      %s33 = sadd.s32 %s32, 1
      %s34 = scalar_select %p31, %s32, %s33
      %p37 = pneg %p31
      %p38 = scmp.eq.s32.totalorder %s22, 2
      %p39 = por %p37, %p38
      %p40 = scmp.ne.s32.totalorder %s32, %s35
      %p41 = scmp.eq.s32.totalorder %s22, 0
      %p42 = por %p40, %p41
      %p43 = scmp.ne.s32.totalorder %s32, %s35
      %p44 = scmp.eq.s32.totalorder %s27, 2
      %p45 = por %p43, %p44
      %p46 = scmp.ne.s32.totalorder %s35, %s36
      %p47 = scmp.eq.s32.totalorder %s27, 0
      %p48 = por %p46, %p47
      %p49 = scmp.ne.s32.totalorder %s35, %s36
      %p50 = scmp.eq.s32.totalorder %s28, 2
      %p51 = por %p49, %p50
      %p53 = scmp.ne.s32.totalorder %s36, %s52
      %p54 = scmp.eq.s32.totalorder %s28, 0
      %p55 = por %p53, %p54
      %s56 = ssub.s32 %s22, %s29
      %p57 = scmp.eq.s32.totalorder %s56, 0
      %s59 = sadd.s32 %s58, 1
      %s60 = scalar_select %p57, %s58, %s59
      %p63 = pneg %p57
      %p64 = scmp.eq.s32.totalorder %s22, 2
      %p65 = por %p63, %p64
      %p66 = scmp.ne.s32.totalorder %s58, %s61
      %p67 = scmp.eq.s32.totalorder %s22, 0
      %p68 = por %p66, %p67
      %p69 = scmp.ne.s32.totalorder %s58, %s61
      %p70 = scmp.eq.s32.totalorder %s27, 2
      %p71 = por %p69, %p70
      %p72 = scmp.ne.s32.totalorder %s61, %s62
      %p73 = scmp.eq.s32.totalorder %s27, 0
      %p74 = por %p72, %p73
      %p75 = scmp.ne.s32.totalorder %s61, %s62
      %p76 = scmp.eq.s32.totalorder %s28, 2
      %p77 = por %p75, %p76
      %p79 = scmp.ne.s32.totalorder %s62, %s78
      %p80 = scmp.eq.s32.totalorder %s28, 0
      %p81 = por %p79, %p80
      %s83 = sadd.s32 %s82, 1
      %p86 = scmp.eq.s32.totalorder %s22, 2
      %p87 = scmp.ne.s32.totalorder %s82, %s84
      %p88 = scmp.eq.s32.totalorder %s22, 0
      %p89 = por %p87, %p88
      %p90 = scmp.ne.s32.totalorder %s82, %s84
      %p91 = scmp.eq.s32.totalorder %s27, 2
      %p92 = por %p90, %p91
      %p93 = scmp.ne.s32.totalorder %s84, %s85
      %p94 = scmp.eq.s32.totalorder %s27, 0
      %p95 = por %p93, %p94
      %p96 = scmp.ne.s32.totalorder %s84, %s85
      %p97 = scmp.eq.s32.totalorder %s28, 2
      %p98 = por %p96, %p97
      %p100 = scmp.ne.s32.totalorder %s85, %s99
      %p101 = scmp.eq.s32.totalorder %s28, 0
      %p102 = por %p100, %p101
      %s104 = sadd.s32 %s103, 1
      %p107 = scmp.eq.s32.totalorder %s22, 2
      %p108 = scmp.ne.s32.totalorder %s103, %s105
      %p109 = scmp.eq.s32.totalorder %s22, 0
      %p110 = por %p108, %p109
      %p111 = scmp.ne.s32.totalorder %s103, %s105
      %p112 = scmp.eq.s32.totalorder %s27, 2
      %p113 = por %p111, %p112
      %p114 = scmp.ne.s32.totalorder %s105, %s106
      %p115 = scmp.eq.s32.totalorder %s27, 0
      %p116 = por %p114, %p115
      %p117 = scmp.ne.s32.totalorder %s105, %s106
      %p118 = scmp.eq.s32.totalorder %s28, 2
      %p119 = por %p117, %p118
      %p121 = scmp.ne.s32.totalorder %s106, %s120
      %p122 = scmp.eq.s32.totalorder %s28, 0
      %p123 = por %p121, %p122
      %s125 = sadd.s32 %s124, 1
      %p128 = scmp.eq.s32.totalorder %s22, 2
      %p129 = scmp.ne.s32.totalorder %s124, %s126
      %p130 = scmp.eq.s32.totalorder %s22, 0
      %p131 = por %p129, %p130
      %p132 = scmp.ne.s32.totalorder %s124, %s126
      %p133 = scmp.eq.s32.totalorder %s27, 2
      %p134 = por %p132, %p133
      %p135 = scmp.ne.s32.totalorder %s126, %s127
      %p136 = scmp.eq.s32.totalorder %s27, 0
      %p137 = por %p135, %p136
      %p138 = scmp.ne.s32.totalorder %s126, %s127
      %p139 = scmp.eq.s32.totalorder %s28, 2
      %p140 = por %p138, %p139
      %p142 = scmp.ne.s32.totalorder %s127, %s141
      %p143 = scmp.eq.s32.totalorder %s28, 0
      %p144 = por %p142, %p143
      %s146 = sadd.s32 %s145, 1
      %p149 = scmp.eq.s32.totalorder %s22, 2
      %p150 = scmp.ne.s32.totalorder %s145, %s147
      %p151 = scmp.eq.s32.totalorder %s22, 0
      %p152 = por %p150, %p151
      %p153 = scmp.ne.s32.totalorder %s145, %s147
      %p154 = scmp.eq.s32.totalorder %s27, 2
      %p155 = por %p153, %p154
      %p156 = scmp.ne.s32.totalorder %s147, %s148
      %p157 = scmp.eq.s32.totalorder %s27, 0
      %p158 = por %p156, %p157
      %p159 = scmp.ne.s32.totalorder %s147, %s148
      %p160 = scmp.eq.s32.totalorder %s28, 2
      %p161 = por %p159, %p160
      %p163 = scmp.ne.s32.totalorder %s148, %s162
      %p164 = scmp.eq.s32.totalorder %s28, 0
      %p165 = por %p163, %p164
      %s166 = ssub.s32 %s22, %s29
      %p167 = scmp.eq.s32.totalorder %s166, 0
      %s169 = sadd.s32 %s168, 1
      %s170 = scalar_select %p167, %s168, %s169
      %p173 = pneg %p167
      %p174 = scmp.eq.s32.totalorder %s22, 2
      %p175 = por %p173, %p174
      %p176 = scmp.ne.s32.totalorder %s168, %s171
      %p177 = scmp.eq.s32.totalorder %s22, 0
      %p178 = por %p176, %p177
      %p179 = scmp.ne.s32.totalorder %s168, %s171
      %p180 = scmp.eq.s32.totalorder %s27, 2
      %p181 = por %p179, %p180
      %p182 = scmp.ne.s32.totalorder %s171, %s172
      %p183 = scmp.eq.s32.totalorder %s27, 0
      %p184 = por %p182, %p183
      %p185 = scmp.ne.s32.totalorder %s171, %s172
      %p186 = scmp.eq.s32.totalorder %s28, 2
      %p187 = por %p185, %p186
      %p189 = scmp.ne.s32.totalorder %s172, %s188
      %p190 = scmp.eq.s32.totalorder %s28, 0
      %p191 = por %p189, %p190
      %p192 = scmp.le.s32.totalorder 1, %s22
      %p193 = scmp.lt.s32.totalorder %s22, 4
      %p194 = pnand %p192, %p193
      %p195 = pneg %p194
      // Predicated region
      $region9: #{tpu_custom_call.1} parent=5 // pred_check
        _
      $region10: #{tpu_custom_call.1} parent=5 // pred_check_branch
        %197 = sbr.rel (%p194) target = $region12
      $region11: #{tpu_custom_call.1} parent=5 // pred_region
        %s198 = ssub.s32 %s22, 1
        // Predicated region
        $region13: #{tpu_custom_call.1} parent=11 // pred_check
          %p199 = pneg %p95
        $region14: #{tpu_custom_call.1} parent=11 // pred_check_branch
          %201 = sbr.rel (%p199) target = $region16
        $region15: #{tpu_custom_call.1} parent=11 // pred_region
          %s203 = ssub.s32 2048, 2048
          %204 = vsyncadd [#allocation6], %s203
          %s205 = sshll.u32 [#allocation7], 4
          %s206 = int_to_ptr.vmem [resolvable:$true] %s205
          %211 = dma.hbm_to_vmem [thread:$0]  %s2, 2048, %s206, [#allocation6], 64, 64, 4
        $region16: #{tpu_custom_call.1} parent=11 // pred_fallthru
          _
        // Predicated region
        $region17: #{tpu_custom_call.1} parent=11 // pred_check
          %p212 = pneg %p116
        $region18: #{tpu_custom_call.1} parent=11 // pred_check_branch
          %214 = sbr.rel (%p212) target = $region20
        $region19: #{tpu_custom_call.1} parent=11 // pred_region
          _
        $region20: #{tpu_custom_call.1} parent=11 // pred_fallthru
          _
        // Predicated region
        $region21: #{tpu_custom_call.1} parent=11 // pred_check
          %p215 = pneg %p137
        $region22: #{tpu_custom_call.1} parent=11 // pred_check_branch
          %217 = sbr.rel (%p215) target = $region24
        $region23: #{tpu_custom_call.1} parent=11 // pred_region
          %s219 = ssub.s32 1024, 1024
          %220 = vsyncadd [#allocation9], %s219
          %s221 = sshll.u32 [#allocation8], 4
          %s222 = int_to_ptr.vmem [resolvable:$true] %s221
          %227 = dma.hbm_to_vmem [thread:$0]  %s4, 1024, %s222, [#allocation9], 64, 64, 4
        $region24: #{tpu_custom_call.1} parent=11 // pred_fallthru
          _
        // Predicated region
        $region25: #{tpu_custom_call.1} parent=11 // pred_check
          %p228 = pneg %p158
        $region26: #{tpu_custom_call.1} parent=11 // pred_check_branch
          %230 = sbr.rel (%p228) target = $region28
        $region27: #{tpu_custom_call.1} parent=11 // pred_region
          _
        $region28: #{tpu_custom_call.1} parent=11 // pred_fallthru
          _
      $region12: #{tpu_custom_call.1} parent=5 // pred_fallthru
        _
      %p231 = scmp.lt.s32.totalorder %s22, 3
      // Predicated region
      $region29: #{tpu_custom_call.1} parent=5 // pred_check
        %p232 = pneg %p231
      $region30: #{tpu_custom_call.1} parent=5 // pred_check_branch
        %234 = sbr.rel (%p232) target = $region32
      $region31: #{tpu_custom_call.1} parent=5 // pred_region
        // Predicated region
        $region33: #{tpu_custom_call.1} parent=31 // pred_check
          %p235 = pneg %p42
        $region34: #{tpu_custom_call.1} parent=31 // pred_check_branch
          %237 = sbr.rel (%p235) target = $region36
        $region35: #{tpu_custom_call.1} parent=31 // pred_region
          %s238 = sand.u32 %s32, 1
          %s239 = scalar_lea.sflag [#allocation3], %s238
          %s240 = sand.u32 %s32, 1
          %s241 = smul.addr %s240, 16
          %s242 = scalar_lea.vmem [#allocation2], %s241
          %s243 = smul.u32 2, %s22
          %s245 = ssub.s32 256, 256
          %246 = vsyncadd %s239, %s245
          %s247 = smul.addr %s243, 128
          %s248 = scalar_lea.hbm %s0, %s247
          %s249 = sshll.u32 %s242, 4
          %s250 = int_to_ptr.vmem [resolvable:$true] %s249
          %255 = dma.hbm_to_vmem [thread:$0]  %s248, 256, %s250, %s239, 128, 128, 8
        $region36: #{tpu_custom_call.1} parent=31 // pred_fallthru
          _
        // Predicated region
        $region37: #{tpu_custom_call.1} parent=31 // pred_check
          %p256 = pneg %p68
        $region38: #{tpu_custom_call.1} parent=31 // pred_check_branch
          %258 = sbr.rel (%p256) target = $region40
        $region39: #{tpu_custom_call.1} parent=31 // pred_region
          %s259 = sand.u32 %s22, 1
          %s260 = scalar_lea.sflag [#allocation6], %s259
          %s261 = sand.u32 %s58, 1
          %s262 = smul.addr %s261, 16
          %s263 = scalar_lea.vmem [#allocation5], %s262
          %s264 = smul.u32 2, %s22
          %s266 = ssub.s32 256, 256
          %267 = vsyncadd %s260, %s266
          %s268 = smul.addr %s264, 128
          %s269 = scalar_lea.hbm %s1, %s268
          %s270 = sshll.u32 %s263, 4
          %s271 = int_to_ptr.vmem [resolvable:$true] %s270
          %276 = dma.hbm_to_vmem [thread:$0]  %s269, 256, %s271, %s260, 128, 128, 8
        $region40: #{tpu_custom_call.1} parent=31 // pred_fallthru
          _
      $region32: #{tpu_custom_call.1} parent=5 // pred_fallthru
        _
      %p277 = scmp.le.s32.totalorder 1, %s22
      %p278 = scmp.lt.s32.totalorder %s22, 4
      %p279 = pnand %p277, %p278
      %p280 = pneg %p279
      // Predicated region
      $region41: #{tpu_custom_call.1} parent=5 // pred_check
        _
      $region42: #{tpu_custom_call.1} parent=5 // pred_check_branch
        %282 = sbr.rel (%p279) target = $region44
      $region43: #{tpu_custom_call.1} parent=5 // pred_region
        %s283 = ssub.s32 %s22, 1
        %s284 = sand.u32 %s35, 1
        %s285 = scalar_lea.sflag [#allocation3], %s284
        %s286 = sand.u32 %s35, 1
        %s287 = smul.addr %s286, 16
        %s288 = scalar_lea.vmem [#allocation2], %s287
        // Predicated region
        $region45: #{tpu_custom_call.1} parent=43 // pred_check
          %p289 = pneg %p48
        $region46: #{tpu_custom_call.1} parent=43 // pred_check_branch
          %291 = sbr.rel (%p289) target = $region48
        $region47: #{tpu_custom_call.1} parent=43 // pred_region
          %292 = dma.done %s285, 256
        $region48: #{tpu_custom_call.1} parent=43 // pred_fallthru
          _
        %s293 = sand.u32 %s27, 1
        %s294 = scalar_lea.sflag [#allocation6], %s293
        %s295 = sand.u32 %s61, 1
        %s296 = smul.addr %s295, 16
        %s297 = scalar_lea.vmem [#allocation5], %s296
        // Predicated region
        $region49: #{tpu_custom_call.1} parent=43 // pred_check
          %p298 = pneg %p74
        $region50: #{tpu_custom_call.1} parent=43 // pred_check_branch
          %300 = sbr.rel (%p298) target = $region52
        $region51: #{tpu_custom_call.1} parent=43 // pred_region
          %301 = dma.done %s294, 256
        $region52: #{tpu_custom_call.1} parent=43 // pred_fallthru
          _
        // Predicated region
        $region53: #{tpu_custom_call.1} parent=43 // pred_check
          %p302 = pneg %p95
        $region54: #{tpu_custom_call.1} parent=43 // pred_check_branch
          %304 = sbr.rel (%p302) target = $region56
        $region55: #{tpu_custom_call.1} parent=43 // pred_region
          %305 = dma.done [#allocation6], 2048
        $region56: #{tpu_custom_call.1} parent=43 // pred_fallthru
          _
        // Predicated region
        $region57: #{tpu_custom_call.1} parent=43 // pred_check
          %p306 = pneg %p137
        $region58: #{tpu_custom_call.1} parent=43 // pred_check_branch
          %308 = sbr.rel (%p306) target = $region60
        $region59: #{tpu_custom_call.1} parent=43 // pred_region
          %309 = dma.done [#allocation9], 1024
        $region60: #{tpu_custom_call.1} parent=43 // pred_fallthru
          _
        %s310 = sand.u32 %s35, 1
        %s311 = scalar_lea.sflag [#allocation3], %s310
        %s312 = sand.u32 %s35, 1
        %s313 = smul.addr %s312, 16
        %s314 = scalar_lea.vmem [#allocation2], %s313
        %p315 = pneg %p48
        %p316 = pneg %p45
        %s317 = sand.u32 %s27, 1
        %s318 = scalar_lea.sflag [#allocation6], %s317
        %s319 = sand.u32 %s61, 1
        %s320 = smul.addr %s319, 16
        %s321 = scalar_lea.vmem [#allocation5], %s320
        %p322 = pneg %p74
        %p323 = pneg %p71
        %p324 = pneg %p95
        %p325 = pneg %p92
        %p326 = pneg %p116
        %p327 = pneg %p113
        %p328 = pneg %p137
        %p329 = pneg %p134
        %p330 = pneg %p158
        %p331 = pneg %p155
        %p332 = pneg %p184
        %p333 = pneg %p181
        %s334 = sand.u32 %s171, 1
        %s335 = scalar_lea.sflag [#allocation4], %s334
        %s336 = sand.u32 %s171, 1
        %s337 = smul.addr %s336, 16
        %s338 = scalar_lea.vmem [#allocation10], %s337
        %s339 = smul.u32 2, %s27
        %s340 = smul.u32 2, %s27
        %s341 = smul.u32 2, %s27
        %v343 = vld [vmem:[%s288] sm:$0xff]
        %v344 = vld [vmem:[%s288 + $0x8] sm:$0xff]
        %v345 = vpack.c.bf16 %v344, %v343
        %v346 = vld [vmem:[#allocation7] sm:$0xf]
        %v347 = vld [vmem:[#allocation7 + $0x4] sm:$0xf]
        %v348 = vld [vmem:[#allocation7 + $0x8] sm:$0xf]
        %v349 = vld [vmem:[#allocation7 + $0xc] sm:$0xf]
        %v350 = vld [vmem:[#allocation7 + $0x10] sm:$0xf]
        %v351 = vld [vmem:[#allocation7 + $0x14] sm:$0xf]
        %v352 = vld [vmem:[#allocation7 + $0x18] sm:$0xf]
        %v353 = vld [vmem:[#allocation7 + $0x1c] sm:$0xf]
        %v354 = vld [vmem:[#allocation7 + $0x20] sm:$0xf]
        %v355 = vld [vmem:[#allocation7 + $0x24] sm:$0xf]
        %v356 = vld [vmem:[#allocation7 + $0x28] sm:$0xf]
        %v357 = vld [vmem:[#allocation7 + $0x2c] sm:$0xf]
        %v358 = vld [vmem:[#allocation7 + $0x30] sm:$0xf]
        %v359 = vld [vmem:[#allocation7 + $0x34] sm:$0xf]
        %v360 = vld [vmem:[#allocation7 + $0x38] sm:$0xf]
        %v361 = vld [vmem:[#allocation7 + $0x3c] sm:$0xf]
        %v362 = vld [vmem:[%s3] sm:$0x1]
        %v364 = vlaneseq
        %v365 = vshrl.u32 %v364, 7
        %v366 = vsub.s32 0, %v365
        %v367 = vrot.slane %v362, %v366
        %v385 = vunpack.c.l.b16 %v346
        %v386 = vunpack.c.l.b16 %v347
        %v387 = vunpack.c.l.b16 %v348
        %v388 = vunpack.c.l.b16 %v349
        %v389 = vunpack.c.l.b16 %v350
        %v390 = vunpack.c.l.b16 %v351
        %v391 = vunpack.c.l.b16 %v352
        %v392 = vunpack.c.l.b16 %v353
        %v393 = vunpack.c.l.b16 %v354
        %v394 = vunpack.c.l.b16 %v355
        %v395 = vunpack.c.l.b16 %v356
        %v396 = vunpack.c.l.b16 %v357
        %v397 = vunpack.c.l.b16 %v358
        %v398 = vunpack.c.l.b16 %v359
        %v399 = vunpack.c.l.b16 %v360
        %v400 = vunpack.c.l.b16 %v361
        %v401 = vpack.c.b16 %v386, %v385
        %v402 = vpack.c.b16 %v388, %v387
        %v403 = vpack.c.b16 %v390, %v389
        %v404 = vpack.c.b16 %v392, %v391
        %v405 = vpack.c.b16 %v394, %v393
        %v406 = vpack.c.b16 %v396, %v395
        %v407 = vpack.c.b16 %v398, %v397
        %v408 = vpack.c.b16 %v400, %v399
        %417 = vmatprep.subr.bf16.mxu0 0
        %418 = vmatpush1.bf16.msra.mxu0 %v401
        %419 = vmatprep.subr.bf16.mxu0 0
        %420 = vmatpush1.bf16.msra.mxu0 %v402
        %421 = vmatprep.subr.bf16.mxu0 0
        %422 = vmatpush1.bf16.msra.mxu0 %v403
        %423 = vmatprep.subr.bf16.mxu0 0
        %424 = vmatpush1.bf16.msra.mxu0 %v404
        %425 = vmatprep.subr.bf16.mxu0 0
        %426 = vmatpush1.bf16.msra.mxu0 %v405
        %427 = vmatprep.subr.bf16.mxu0 0
        %428 = vmatpush1.bf16.msra.mxu0 %v406
        %429 = vmatprep.subr.bf16.mxu0 0
        %430 = vmatpush1.bf16.msra.mxu0 %v407
        %431 = vmatprep.subr.bf16.mxu0 0
        %432 = vmatpush1.bf16.msra.mxu0 %v408
        %433 = vmatprep.subr.bf16.mxu0 0
        %434 = vmatpush1.bf16.msra.mxu0 0
        %435 = vmatprep.subr.bf16.mxu0 0
        %436 = vmatpush1.bf16.msra.mxu0 0
        %437 = vmatprep.subr.bf16.mxu0 0
        %438 = vmatpush1.bf16.msra.mxu0 0
        %439 = vmatprep.subr.bf16.mxu0 0
        %440 = vmatpush1.bf16.msra.mxu0 0
        %441 = vmatprep.subr.bf16.mxu0 0
        %442 = vmatpush1.bf16.msra.mxu0 0
        %443 = vmatprep.subr.bf16.mxu0 0
        %444 = vmatpush1.bf16.msra.mxu0 0
        %445 = vmatprep.subr.bf16.mxu0 0
        %446 = vmatpush1.bf16.msra.mxu0 0
        %447 = vmatprep.subr.bf16.mxu0 0
        %448 = vmatpush1.bf16.msra.mxu0 0
        %449 = vmatprep.mubr.bf16.mxu0 0
        %450 = vmatmul.mubr.bf16.gmra.mrb[0].mxu0 %v345
        %v451 = vpop.f32.mrb[0].mxu0
        %v452 = vadd.f32 %v367, %v451
        %v453 = vpop.f32.mrb[0].mxu0
        %v454 = vpop.f32.mrb[0].mxu0
        %v455 = vadd.f32 %v367, %v454
        %v456 = vpop.f32.mrb[0].mxu0
        %457 = vdwg.mxu0
        %v458 = vmax.f32 %v452, 0.0
        %v459 = vmax.f32 %v455, 0.0
        %v460 = vpack.c.bf16 %v459, %v458
        %s461 = scalar_lea.vmem [#allocation7], 64
        %v462 = vld [vmem:[%s461] sm:$0xf]
        %v463 = vld [vmem:[%s461 + $0x4] sm:$0xf]
        %v464 = vld [vmem:[%s461 + $0x8] sm:$0xf]
        %v465 = vld [vmem:[%s461 + $0xc] sm:$0xf]
        %v466 = vld [vmem:[%s461 + $0x10] sm:$0xf]
        %v467 = vld [vmem:[%s461 + $0x14] sm:$0xf]
        %v468 = vld [vmem:[%s461 + $0x18] sm:$0xf]
        %v469 = vld [vmem:[%s461 + $0x1c] sm:$0xf]
        %v470 = vld [vmem:[%s461 + $0x20] sm:$0xf]
        %v471 = vld [vmem:[%s461 + $0x24] sm:$0xf]
        %v472 = vld [vmem:[%s461 + $0x28] sm:$0xf]
        %v473 = vld [vmem:[%s461 + $0x2c] sm:$0xf]
        %v474 = vld [vmem:[%s461 + $0x30] sm:$0xf]
        %v475 = vld [vmem:[%s461 + $0x34] sm:$0xf]
        %v476 = vld [vmem:[%s461 + $0x38] sm:$0xf]
        %v477 = vld [vmem:[%s461 + $0x3c] sm:$0xf]
        %s478 = scalar_lea.vmem %s3, 1
        %v479 = vld [vmem:[%s478] sm:$0x1]
        %v481 = vlaneseq
        %v482 = vshrl.u32 %v481, 7
        %v483 = vsub.s32 0, %v482
        %v484 = vrot.slane %v479, %v483
        %v502 = vunpack.c.l.b16 %v462
        %v503 = vunpack.c.l.b16 %v463
        %v504 = vunpack.c.l.b16 %v464
        %v505 = vunpack.c.l.b16 %v465
        %v506 = vunpack.c.l.b16 %v466
        %v507 = vunpack.c.l.b16 %v467
        %v508 = vunpack.c.l.b16 %v468
        %v509 = vunpack.c.l.b16 %v469
        %v510 = vunpack.c.l.b16 %v470
        %v511 = vunpack.c.l.b16 %v471
        %v512 = vunpack.c.l.b16 %v472
        %v513 = vunpack.c.l.b16 %v473
        %v514 = vunpack.c.l.b16 %v474
        %v515 = vunpack.c.l.b16 %v475
        %v516 = vunpack.c.l.b16 %v476
        %v517 = vunpack.c.l.b16 %v477
        %v518 = vpack.c.b16 %v503, %v502
        %v519 = vpack.c.b16 %v505, %v504
        %v520 = vpack.c.b16 %v507, %v506
        %v521 = vpack.c.b16 %v509, %v508
        %v522 = vpack.c.b16 %v511, %v510
        %v523 = vpack.c.b16 %v513, %v512
        %v524 = vpack.c.b16 %v515, %v514
        %v525 = vpack.c.b16 %v517, %v516
        %534 = vmatprep.subr.bf16.mxu0 0
        %535 = vmatpush1.bf16.msra.mxu0 %v518
        %536 = vmatprep.subr.bf16.mxu0 0
        %537 = vmatpush1.bf16.msra.mxu0 %v519
        %538 = vmatprep.subr.bf16.mxu0 0
        %539 = vmatpush1.bf16.msra.mxu0 %v520
        %540 = vmatprep.subr.bf16.mxu0 0
        %541 = vmatpush1.bf16.msra.mxu0 %v521
        %542 = vmatprep.subr.bf16.mxu0 0
        %543 = vmatpush1.bf16.msra.mxu0 %v522
        %544 = vmatprep.subr.bf16.mxu0 0
        %545 = vmatpush1.bf16.msra.mxu0 %v523
        %546 = vmatprep.subr.bf16.mxu0 0
        %547 = vmatpush1.bf16.msra.mxu0 %v524
        %548 = vmatprep.subr.bf16.mxu0 0
        %549 = vmatpush1.bf16.msra.mxu0 %v525
        %550 = vmatprep.subr.bf16.mxu0 0
        %551 = vmatpush1.bf16.msra.mxu0 0
        %552 = vmatprep.subr.bf16.mxu0 0
        %553 = vmatpush1.bf16.msra.mxu0 0
        %554 = vmatprep.subr.bf16.mxu0 0
        %555 = vmatpush1.bf16.msra.mxu0 0
        %556 = vmatprep.subr.bf16.mxu0 0
        %557 = vmatpush1.bf16.msra.mxu0 0
        %558 = vmatprep.subr.bf16.mxu0 0
        %559 = vmatpush1.bf16.msra.mxu0 0
        %560 = vmatprep.subr.bf16.mxu0 0
        %561 = vmatpush1.bf16.msra.mxu0 0
        %562 = vmatprep.subr.bf16.mxu0 0
        %563 = vmatpush1.bf16.msra.mxu0 0
        %564 = vmatprep.subr.bf16.mxu0 0
        %565 = vmatpush1.bf16.msra.mxu0 0
        %566 = vmatprep.mubr.bf16.mxu0 0
        %567 = vmatmul.mubr.bf16.gmra.mrb[0].mxu0 %v460
        %v568 = vpop.f32.mrb[0].mxu0
        %v569 = vadd.f32 %v484, %v568
        %v570 = vpop.f32.mrb[0].mxu0
        %v571 = vpop.f32.mrb[0].mxu0
        %v572 = vadd.f32 %v484, %v571
        %v573 = vpop.f32.mrb[0].mxu0
        %574 = vdwg.mxu0
        %v575 = vld [vmem:[%s297] sm:$0xff]
        %v576 = vld [vmem:[%s297 + $0x8] sm:$0xff]
        %v577 = vpack.c.bf16 %v576, %v575
        %v578 = vld [vmem:[#allocation8] sm:$0xf]
        %v579 = vld [vmem:[#allocation8 + $0x4] sm:$0xf]
        %v580 = vld [vmem:[#allocation8 + $0x8] sm:$0xf]
        %v581 = vld [vmem:[#allocation8 + $0xc] sm:$0xf]
        %v582 = vld [vmem:[#allocation8 + $0x10] sm:$0xf]
        %v583 = vld [vmem:[#allocation8 + $0x14] sm:$0xf]
        %v584 = vld [vmem:[#allocation8 + $0x18] sm:$0xf]
        %v585 = vld [vmem:[#allocation8 + $0x1c] sm:$0xf]
        %v586 = vld [vmem:[#allocation8 + $0x20] sm:$0xf]
        %v587 = vld [vmem:[#allocation8 + $0x24] sm:$0xf]
        %v588 = vld [vmem:[#allocation8 + $0x28] sm:$0xf]
        %v589 = vld [vmem:[#allocation8 + $0x2c] sm:$0xf]
        %v590 = vld [vmem:[#allocation8 + $0x30] sm:$0xf]
        %v591 = vld [vmem:[#allocation8 + $0x34] sm:$0xf]
        %v592 = vld [vmem:[#allocation8 + $0x38] sm:$0xf]
        %v593 = vld [vmem:[#allocation8 + $0x3c] sm:$0xf]
        %v594 = vld [vmem:[%s5] sm:$0x1]
        %v596 = vlaneseq
        %v597 = vshrl.u32 %v596, 7
        %v598 = vsub.s32 0, %v597
        %v599 = vrot.slane %v594, %v598
        %v617 = vunpack.c.l.b16 %v578
        %v618 = vunpack.c.l.b16 %v579
        %v619 = vunpack.c.l.b16 %v580
        %v620 = vunpack.c.l.b16 %v581
        %v621 = vunpack.c.l.b16 %v582
        %v622 = vunpack.c.l.b16 %v583
        %v623 = vunpack.c.l.b16 %v584
        %v624 = vunpack.c.l.b16 %v585
        %v625 = vunpack.c.l.b16 %v586
        %v626 = vunpack.c.l.b16 %v587
        %v627 = vunpack.c.l.b16 %v588
        %v628 = vunpack.c.l.b16 %v589
        %v629 = vunpack.c.l.b16 %v590
        %v630 = vunpack.c.l.b16 %v591
        %v631 = vunpack.c.l.b16 %v592
        %v632 = vunpack.c.l.b16 %v593
        %v633 = vpack.c.b16 %v618, %v617
        %v634 = vpack.c.b16 %v620, %v619
        %v635 = vpack.c.b16 %v622, %v621
        %v636 = vpack.c.b16 %v624, %v623
        %v637 = vpack.c.b16 %v626, %v625
        %v638 = vpack.c.b16 %v628, %v627
        %v639 = vpack.c.b16 %v630, %v629
        %v640 = vpack.c.b16 %v632, %v631
        %649 = vmatprep.subr.bf16.mxu0 0
        %650 = vmatpush1.bf16.msra.mxu0 %v633
        %651 = vmatprep.subr.bf16.mxu0 0
        %652 = vmatpush1.bf16.msra.mxu0 %v634
        %653 = vmatprep.subr.bf16.mxu0 0
        %654 = vmatpush1.bf16.msra.mxu0 %v635
        %655 = vmatprep.subr.bf16.mxu0 0
        %656 = vmatpush1.bf16.msra.mxu0 %v636
        %657 = vmatprep.subr.bf16.mxu0 0
        %658 = vmatpush1.bf16.msra.mxu0 %v637
        %659 = vmatprep.subr.bf16.mxu0 0
        %660 = vmatpush1.bf16.msra.mxu0 %v638
        %661 = vmatprep.subr.bf16.mxu0 0
        %662 = vmatpush1.bf16.msra.mxu0 %v639
        %663 = vmatprep.subr.bf16.mxu0 0
        %664 = vmatpush1.bf16.msra.mxu0 %v640
        %665 = vmatprep.subr.bf16.mxu0 0
        %666 = vmatpush1.bf16.msra.mxu0 0
        %667 = vmatprep.subr.bf16.mxu0 0
        %668 = vmatpush1.bf16.msra.mxu0 0
        %669 = vmatprep.subr.bf16.mxu0 0
        %670 = vmatpush1.bf16.msra.mxu0 0
        %671 = vmatprep.subr.bf16.mxu0 0
        %672 = vmatpush1.bf16.msra.mxu0 0
        %673 = vmatprep.subr.bf16.mxu0 0
        %674 = vmatpush1.bf16.msra.mxu0 0
        %675 = vmatprep.subr.bf16.mxu0 0
        %676 = vmatpush1.bf16.msra.mxu0 0
        %677 = vmatprep.subr.bf16.mxu0 0
        %678 = vmatpush1.bf16.msra.mxu0 0
        %679 = vmatprep.subr.bf16.mxu0 0
        %680 = vmatpush1.bf16.msra.mxu0 0
        %681 = vmatprep.mubr.bf16.mxu0 0
        %682 = vmatmul.mubr.bf16.gmra.mrb[0].mxu0 %v577
        %v683 = vpop.f32.mrb[0].mxu0
        %v684 = vadd.f32 %v599, %v683
        %v685 = vpop.f32.mrb[0].mxu0
        %v686 = vpop.f32.mrb[0].mxu0
        %v687 = vadd.f32 %v599, %v686
        %v688 = vpop.f32.mrb[0].mxu0
        %689 = vdwg.mxu0
        %v690 = vmax.f32 %v684, 0.0
        %v691 = vmax.f32 %v687, 0.0
        %v692 = vadd.f32 %v569, %v690
        %v693 = vadd.f32 %v572, %v691
        %694 = vst [vmem:[%s338] sm:$0xff] %v692
        %695 = vst [vmem:[%s338 + $0x8] sm:$0xff] %v693
        %s696 = sand.u32 %s171, 1
        %s697 = scalar_lea.sflag [#allocation4], %s696
        %s698 = sand.u32 %s171, 1
        %s699 = smul.addr %s698, 16
        %s700 = scalar_lea.vmem [#allocation10], %s699
        // Predicated region
        $region61: #{tpu_custom_call.1} parent=43 // pred_check
          %p701 = pneg %p181
        $region62: #{tpu_custom_call.1} parent=43 // pred_check_branch
          %703 = sbr.rel (%p701) target = $region64
        $region63: #{tpu_custom_call.1} parent=43 // pred_region
          %s704 = smul.u32 2, %s27
          %s706 = ssub.s32 256, 256
          %707 = vsyncadd %s697, %s706
          %s708 = smul.addr %s704, 128
          %s709 = scalar_lea.hbm %s6, %s708
          %s710 = sshll.u32 %s700, 4
          %s711 = int_to_ptr.vmem [resolvable:$true] %s710
          %716 = dma.vmem_to_hbm [thread:$0]  %s711, 256, %s709, %s697, 128, 128, 8
        $region64: #{tpu_custom_call.1} parent=43 // pred_fallthru
          _
      $region44: #{tpu_custom_call.1} parent=5 // pred_fallthru
        _
      %p717 = scmp.le.s32.totalorder 2, %s22
      // Predicated region
      $region65: #{tpu_custom_call.1} parent=5 // pred_check
        %p718 = pneg %p717
      $region66: #{tpu_custom_call.1} parent=5 // pred_check_branch
        %720 = sbr.rel (%p718) target = $region68
      $region67: #{tpu_custom_call.1} parent=5 // pred_region
        %s721 = ssub.s32 %s22, 2
        // Predicated region
        $region69: #{tpu_custom_call.1} parent=67 // pred_check
          %p722 = pneg %p187
        $region70: #{tpu_custom_call.1} parent=67 // pred_check_branch
          %724 = sbr.rel (%p722) target = $region72
        $region71: #{tpu_custom_call.1} parent=67 // pred_region
          %s725 = sand.u32 %s172, 1
          %s726 = scalar_lea.sflag [#allocation4], %s725
          %s727 = sand.u32 %s172, 1
          %s728 = smul.addr %s727, 16
          %s729 = scalar_lea.vmem [#allocation10], %s728
          %730 = dma.done %s726, 256
        $region72: #{tpu_custom_call.1} parent=67 // pred_fallthru
          _
      $region68: #{tpu_custom_call.1} parent=5 // pred_fallthru
        _
    $region6: #{tpu_custom_call.1} parent=1 // loop_footer
      %s26 = sadd.s32 1, %s22
    $region7: #{tpu_custom_call.1} parent=1 // loop_footer_branch
      %21 = sbr.rel target = $region3
    $region8: #{tpu_custom_call.1} parent=1 // loop_exit
      _
    %731 = vsyncpa [#allocation3], 1
    %s732 = scalar_lea.sflag [#allocation3], 1
    %733 = vsyncpa %s732, 1
    %734 = vsyncpa [#allocation6], 1
    %s735 = scalar_lea.sflag [#allocation6], 1
    %736 = vsyncpa %s735, 1
    %737 = vsyncpa [#allocation9], 1
    %738 = vsyncpa [#allocation4], 1
    %s739 = scalar_lea.sflag [#allocation4], 1
    %740 = vsyncpa %s739, 1

</llo_original>
